<compile_context>
chip_gen: v7x
topology: tpu7x:2x2x1
jax: 0.10.0
libtpu: 0.0.40
codegen_flags: <defaults>
</compile_context>

<pallas_src>
import re
from functools import partial

import numpy as np
import jax
import jax.numpy as jnp
from jax import lax
from jax.experimental import pallas as pl
from jax.experimental.pallas import tpu as pltpu

# ----------------------------- model config ---------------------------------
D_VOCAB = 64
N_CTX = 16
D_MODEL = 32
N_HEADS = 4
D_HEAD = 8
D_MLP = 64
N_LAYERS = 2
LN_EPS = 1e-5

assert N_HEADS * D_HEAD == D_MODEL

_LANES = 128
_BLK_F32_ROWS = 8                          # per-block small-param row group (f32 slab)
_BLK_BF16_ROWS = 3 * D_MODEL + D_MLP       # W_QKV(32) + W_O(32) + W_in(32) + W_out(64)


def _rnd(x, m):
    return -(-x // m) * m


# --------------------------- slab layouts (shared) ---------------------------
def _f32_layout(B, S, n_blocks):
    """Row offsets inside the packed (rows, 128) float32 slab."""
    T = B * S
    off = 0
    lay = {}
    lay["W_E"] = off
    off += _rnd(D_VOCAB, 8)
    lay["pos"] = off
    off += _rnd(T, 8)
    lay["mask"] = off
    off += _rnd(T, 8)
    lay["blk"] = off
    off += _BLK_F32_ROWS * n_blocks
    return lay, _rnd(off, 8)


def _bf16_layout(n_blocks):
    lay = {"blk": 0}
    return lay, _rnd(_BLK_BF16_ROWS * n_blocks, 16)


# ------------------------------ kernel helpers -------------------------------
def _layernorm(x, w, b):
    mu = jnp.mean(x, axis=-1, keepdims=True)
    c = x - mu
    var = jnp.mean(c * c, axis=-1, keepdims=True)
    return c * lax.rsqrt(var + LN_EPS) * w + b


def _gelu_new(x):
    # gelu_new (tanh approximation), the TransformerLens default activation.
    return 0.5 * x * (1.0 + jnp.tanh(0.7978845608028654 * (x + 0.044715 * x * x * x)))


# ------------------------------ fused Pallas kernel --------------------------
def _make_fused_kernel(n_blocks, hook_kind, B, S):
    """Embedding + blocks 0..n_blocks-1 + hook capture in one kernel invocation."""
    T = B * S
    flay, _ = _f32_layout(B, S, n_blocks)
    wlay, _ = _bf16_layout(n_blocks)
    bf16 = jnp.bfloat16

    def kernel(tok_ref, f_ref, w_ref, out_ref):
        # ---- embedding as a one-hot matmul (MXU), no dynamic gather ----
        tok = tok_ref[...]                                              # (T, 1) int32
        iota = lax.broadcasted_iota(jnp.int32, (T, D_VOCAB), 1)
        one_hot = (iota == tok).astype(jnp.float32)                     # (T, V)
        w_e = f_ref[flay["W_E"]:flay["W_E"] + D_VOCAB, 0:D_MODEL]       # (V, D) f32
        pos = f_ref[flay["pos"]:flay["pos"] + T, 0:D_MODEL]             # (T, D) f32
        resid = jnp.dot(one_hot, w_e, preferred_element_type=jnp.float32) + pos

        # Additive block-diagonal causal mask, precomputed host-side.
        mask_add = f_ref[flay["mask"]:flay["mask"] + T, 0:T]            # (T, T) f32

        act_val = resid   # always overwritten below (n_blocks >= 1)

        for l in range(n_blocks):
            if l == n_blocks - 1 and hook_kind == "resid_pre":
                act_val = resid

            # ---- per-block small f32 params: one (8,128) load, sliced in vregs ----
            fb = flay["blk"] + l * _BLK_F32_ROWS
            small = f_ref[fb:fb + _BLK_F32_ROWS, :]
            ln1_w = small[0:1, 0:D_MODEL]
            ln1_b = small[1:2, 0:D_MODEL]
            b_qkv = small[2:3, 0:3 * D_MODEL]
            b_o = small[3:4, 0:D_MODEL]
            ln2_w = small[4:5, 0:D_MODEL]
            ln2_b = small[5:6, 0:D_MODEL]
            b_in = small[6:7, 0:D_MLP]
            b_out = small[7:8, 0:D_MODEL]

            # ---- per-block bf16 matmul weights (static slices of the bf16 slab) ----
            wb = wlay["blk"] + l * _BLK_BF16_ROWS
            w_qkv = w_ref[wb:wb + D_MODEL, 0:3 * D_MODEL]               # (D, 3D)
            w_o = w_ref[wb + D_MODEL:wb + 2 * D_MODEL, 0:D_MODEL]       # (H*Dh, D)
            w_in = w_ref[wb + 2 * D_MODEL:wb + 3 * D_MODEL, 0:D_MLP]    # (D, Dm)
            w_out = w_ref[wb + 3 * D_MODEL:wb + 3 * D_MODEL + D_MLP, 0:D_MODEL]

            # ------------- attention: fused QKV projection -------------
            xn = _layernorm(resid, ln1_w, ln1_b)                        # (T, D) f32
            # 1/sqrt(d_head) folded into the W_Q / b_Q columns at packing time.
            qkv = jnp.dot(xn.astype(bf16), w_qkv,
                          preferred_element_type=jnp.float32) + b_qkv   # (T, 3D) f32
            qkv_bf = qkv.astype(bf16)

            z_parts = []
            for h in range(N_HEADS):
                c0 = h * D_HEAD
                qh = qkv_bf[:, c0:c0 + D_HEAD]                                     # (T, Dh)
                kh = qkv_bf[:, D_MODEL + c0:D_MODEL + c0 + D_HEAD]                 # (T, Dh)
                vh = qkv_bf[:, 2 * D_MODEL + c0:2 * D_MODEL + c0 + D_HEAD]         # (T, Dh)
                s = lax.dot_general(qh, kh, (((1,), (1,)), ((), ())),
                                    preferred_element_type=jnp.float32) + mask_add
                s = s - jnp.max(s, axis=-1, keepdims=True)
                e = jnp.exp(s)
                p = e / jnp.sum(e, axis=-1, keepdims=True)              # exact softmax
                z_parts.append(jnp.dot(p.astype(bf16), vh,
                                       preferred_element_type=jnp.float32))        # (T, Dh)

            z2 = jnp.concatenate(z_parts, axis=1)                       # (T, H*Dh) f32
            attn = jnp.dot(z2.astype(bf16), w_o,
                           preferred_element_type=jnp.float32) + b_o    # (T, D)
            resid_mid = resid + attn

            # ------------------------- MLP -------------------------
            xn2 = _layernorm(resid_mid, ln2_w, ln2_b)
            pre = jnp.dot(xn2.astype(bf16), w_in,
                          preferred_element_type=jnp.float32) + b_in
            mlp = jnp.dot(_gelu_new(pre).astype(bf16), w_out,
                          preferred_element_type=jnp.float32) + b_out
            resid = resid_mid + mlp

            if l == n_blocks - 1 and hook_kind == "resid_post":
                act_val = resid

        # Single merged store: rows [0,T) = final residual, rows [T,2T) = hook act.
        out_ref[...] = jnp.concatenate([resid, act_val], axis=0).astype(out_ref.dtype)

    return kernel


@partial(jax.jit, static_argnames=("n_blocks", "hook_kind"))
def _fused_forward(tokens, fslab, wslab, n_blocks, hook_kind):
    B, S = tokens.shape
    T = B * S
    kernel = _make_fused_kernel(n_blocks, hook_kind, B, S)
    vmem = pl.BlockSpec(memory_space=pltpu.MemorySpace.VMEM)
    y = pl.pallas_call(
        kernel,
        out_shape=jax.ShapeDtypeStruct((2 * T, D_MODEL), jnp.float32),
        in_specs=[vmem, vmem, vmem],
        out_specs=vmem,
    )(tokens.reshape(T, 1).astype(jnp.int32), fslab, wslab)
    return y[:T].reshape(B, S, D_MODEL), y[T:].reshape(B, S, D_MODEL)


# --------------------------- host-side slab packing --------------------------
def _merge_heads_in(w):
    # (H, D_MODEL, D_HEAD) -> (D_MODEL, H*D_HEAD), head-major columns.
    return np.transpose(np.asarray(w), (1, 0, 2)).reshape(D_MODEL, N_HEADS * D_HEAD)


def _build_bf16_slab(params, n_blocks):
    lay, rows = _bf16_layout(n_blocks)
    slab = np.zeros((rows, _LANES), np.float32)
    scale = 1.0 / (D_HEAD ** 0.5)
    for l in range(n_blocks):
        blk = params["blocks"][l]
        w_qkv = np.concatenate(
            [_merge_heads_in(blk["w_q"]) * scale,
             _merge_heads_in(blk["w_k"]),
             _merge_heads_in(blk["w_v"])], axis=1)                       # (D, 3D)
        w_o = np.asarray(blk["w_o"]).reshape(N_HEADS * D_HEAD, D_MODEL)  # (H*Dh, D)
        base = lay["blk"] + l * _BLK_BF16_ROWS
        slab[base:base + D_MODEL, 0:3 * D_MODEL] = w_qkv
        slab[base + D_MODEL:base + 2 * D_MODEL, 0:D_MODEL] = w_o
        slab[base + 2 * D_MODEL:base + 3 * D_MODEL, 0:D_MLP] = np.asarray(blk["w_in"])
        slab[base + 3 * D_MODEL:base + 3 * D_MODEL + D_MLP, 0:D_MODEL] = np.asarray(blk["w_out"])
    return jnp.asarray(slab, dtype=jnp.bfloat16)


def _build_f32_slab(params, n_blocks, B, S):
    T = B * S
    lay, rows = _f32_layout(B, S, n_blocks)
    slab = np.zeros((rows, _LANES), np.float32)
    slab[lay["W_E"]:lay["W_E"] + D_VOCAB, 0:D_MODEL] = np.asarray(params["W_E"])
    slab[lay["pos"]:lay["pos"] + T, 0:D_MODEL] = np.tile(
        np.asarray(params["W_pos"])[:S], (B, 1))
    idx = np.arange(T)
    same_batch = (idx[:, None] // S) == (idx[None, :] // S)
    causal = (idx[None, :] % S) <= (idx[:, None] % S)
    slab[lay["mask"]:lay["mask"] + T, 0:T] = np.where(
        same_batch & causal, 0.0, -1e30).astype(np.float32)
    scale = 1.0 / (D_HEAD ** 0.5)
    for l in range(n_blocks):
        blk = params["blocks"][l]
        base = lay["blk"] + l * _BLK_F32_ROWS
        b_qkv = np.concatenate(
            [np.asarray(blk["b_q"]).reshape(-1) * scale,
             np.asarray(blk["b_k"]).reshape(-1),
             np.asarray(blk["b_v"]).reshape(-1)])
        slab[base + 0, 0:D_MODEL] = np.asarray(blk["ln1_w"]).reshape(-1)
        slab[base + 1, 0:D_MODEL] = np.asarray(blk["ln1_b"]).reshape(-1)
        slab[base + 2, 0:3 * D_MODEL] = b_qkv
        slab[base + 3, 0:D_MODEL] = np.asarray(blk["b_o"]).reshape(-1)
        slab[base + 4, 0:D_MODEL] = np.asarray(blk["ln2_w"]).reshape(-1)
        slab[base + 5, 0:D_MODEL] = np.asarray(blk["ln2_b"]).reshape(-1)
        slab[base + 6, 0:D_MLP] = np.asarray(blk["b_in"]).reshape(-1)
        slab[base + 7, 0:D_MODEL] = np.asarray(blk["b_out"]).reshape(-1)
    return jnp.asarray(slab)


# ------------------------- parameter initialization -------------------------
def init_params(key):
    keys = jax.random.split(key, 4 + N_LAYERS)
    params = {
        "W_E": 0.02 * jax.random.normal(keys[0], (D_VOCAB, D_MODEL), jnp.float32),
        "W_pos": 0.02 * jax.random.normal(keys[1], (N_CTX, D_MODEL), jnp.float32),
        "blocks": [],
    }
    for l in range(N_LAYERS):
        ks = jax.random.split(keys[4 + l], 6)
        blk = {
            "ln1_w": jnp.ones((1, D_MODEL), jnp.float32),
            "ln1_b": jnp.zeros((1, D_MODEL), jnp.float32),
            # TransformerLens-style per-head layouts.
            "w_q": 0.05 * jax.random.normal(ks[0], (N_HEADS, D_MODEL, D_HEAD), jnp.float32),
            "b_q": jnp.zeros((N_HEADS, 1, D_HEAD), jnp.float32),
            "w_k": 0.05 * jax.random.normal(ks[1], (N_HEADS, D_MODEL, D_HEAD), jnp.float32),
            "b_k": jnp.zeros((N_HEADS, 1, D_HEAD), jnp.float32),
            "w_v": 0.05 * jax.random.normal(ks[2], (N_HEADS, D_MODEL, D_HEAD), jnp.float32),
            "b_v": jnp.zeros((N_HEADS, 1, D_HEAD), jnp.float32),
            "w_o": 0.05 * jax.random.normal(ks[3], (N_HEADS, D_HEAD, D_MODEL), jnp.float32),
            "b_o": jnp.zeros((1, D_MODEL), jnp.float32),
            "ln2_w": jnp.ones((1, D_MODEL), jnp.float32),
            "ln2_b": jnp.zeros((1, D_MODEL), jnp.float32),
            "w_in": 0.05 * jax.random.normal(ks[4], (D_MODEL, D_MLP), jnp.float32),
            "b_in": jnp.zeros((1, D_MLP), jnp.float32),
            "w_out": 0.05 * jax.random.normal(ks[5], (D_MLP, D_MODEL), jnp.float32),
            "b_out": jnp.zeros((1, D_MODEL), jnp.float32),
        }
        params["blocks"].append(blk)
    return params


# ----------------------------- wrapper module --------------------------------
class TransformerLensWrapper:
    """JAX/Pallas equivalent of the PyTorch TransformerLensWrapper."""

    def __init__(self, params, hook_point: str):
        layer_match = re.match(r"blocks\.(\d+)\.", hook_point)
        assert layer_match, (
            f"Error: expecting hook_point to be 'blocks.{{layer}}.{{...}}', got {hook_point!r}"
        )
        self.hook_point = hook_point
        self.hook_layer = int(layer_match.group(1))
        assert self.hook_layer < N_LAYERS
        self.hook_point_resid = f"blocks.{self.hook_layer}.hook_resid_post"
        self.hook_point_resid_final = f"blocks.{N_LAYERS - 1}.hook_resid_post"

        if hook_point.endswith("hook_resid_pre"):
            self.hook_kind = "resid_pre"
        elif hook_point.endswith("hook_resid_post"):
            self.hook_kind = "resid_post"
        else:
            # TODO(synk): other hook kinds (hook_z, hook_mlp_out, ...) would need extra
            # kernel outputs; only resid_pre / resid_post hooks are supported here.
            raise AssertionError(f"unsupported hook_point {hook_point!r}")

        # stop_at_layer = hook_layer + 1  => run blocks 0..hook_layer.
        self.n_blocks = self.hook_layer + 1
        self._params = params

        # Batch/seq-independent bf16 weight slab built once; f32 slab (contains the
        # positional slab and the block-diagonal causal mask) cached per (B, S).
        self._wslab = _build_bf16_slab(params, self.n_blocks)
        self._fslab_cache = {}

    def _fslab(self, B, S):
        key = (B, S)
        if key not in self._fslab_cache:
            self._fslab_cache[key] = _build_f32_slab(self._params, self.n_blocks, B, S)
        return self._fslab_cache[key]

    def forward(self, tokens, return_logits: bool = True):
        B, S = tokens.shape
        assert S <= N_CTX
        output, activation = _fused_forward(
            tokens, self._fslab(B, S), self._wslab,
            n_blocks=self.n_blocks, hook_kind=self.hook_kind)
        if return_logits:
            return output, activation
        return activation


# ---------------------------------- main -------------------------------------
if __name__ == "__main__":
    key = jax.random.PRNGKey(0)
    pkey, tkey = jax.random.split(key)
    params = init_params(pkey)

    batch, seq = 2, 8
    tokens = jax.random.randint(tkey, (batch, seq), 0, D_VOCAB, dtype=jnp.int32)

    wrapper = TransformerLensWrapper(params, hook_point="blocks.1.hook_resid_pre")
    output, activation = wrapper.forward(tokens, return_logits=True)
    jax.block_until_ready((output, activation))

    assert output.shape == (batch, seq, D_MODEL)
    assert activation.shape == (batch, seq, D_MODEL)
    assert jnp.all(jnp.isfinite(output)) and jnp.all(jnp.isfinite(activation))

    # Also exercise the return_logits=False path and a resid_post hook.
    wrapper2 = TransformerLensWrapper(params, hook_point="blocks.0.hook_resid_post")
    act_only = wrapper2.forward(tokens, return_logits=False)
    jax.block_until_ready(act_only)
    assert act_only.shape == (batch, seq, D_MODEL)
    assert jnp.all(jnp.isfinite(act_only))

    print("KERNEL_OK")
</pallas_src>

<mosaic_0001>
module attributes {stable_mosaic.version = 11 : i64} {
  func.func @kernel(%arg0: memref<16x1xi32, #tpu.memory_space<vmem>>, %arg1: memref<112x128xf32, #tpu.memory_space<vmem>>, %arg2: memref<320x128xbf16, #tpu.memory_space<vmem>>, %arg3: memref<32x32xf32, #tpu.memory_space<vmem>>) attributes {dimension_semantics = [], scalar_prefetch = 0 : i64, scratch_operands = 0 : i64, tpu.core_type = #tpu.core_type<tc>} {
    %c0 = arith.constant 0 : index
    %c0_0 = arith.constant 0 : index
    %0 = vector.load %arg0[%c0, %c0_0] : memref<16x1xi32, #tpu.memory_space<vmem>>, vector<16x1xi32>
    %1 = tpu.iota {dimensions = array<i32: 1>} : vector<16x64xi32>
    %2 = vector.broadcast %0 : vector<16x1xi32> to vector<16x64xi32>
    %3 = arith.cmpi eq, %1, %2 : vector<16x64xi32>
    %4 = arith.extui %3 : vector<16x64xi1> to vector<16x64xi32>
    %5 = arith.sitofp %4 : vector<16x64xi32> to vector<16x64xf32>
    %c0_1 = arith.constant 0 : index
    %c0_2 = arith.constant 0 : index
    %6 = vector.load %arg1[%c0_1, %c0_2] : memref<112x128xf32, #tpu.memory_space<vmem>>, vector<64x32xf32>
    %c64 = arith.constant 64 : index
    %c0_3 = arith.constant 0 : index
    %7 = vector.load %arg1[%c64, %c0_3] : memref<112x128xf32, #tpu.memory_space<vmem>>, vector<16x32xf32>
    %cst = arith.constant dense<0.000000e+00> : vector<16x32xf32>
    %8 = tpu.matmul %5, %6, %cst {dimension_numbers = #tpu.dot_dimension_numbers<[1], [0], [0], [1], [0, 0, 1, 1], [], []>} : vector<16x64xf32>, vector<64x32xf32>, vector<16x32xf32> -> vector<16x32xf32>
    %9 = arith.addf %8, %7 : vector<16x32xf32>
    %c80 = arith.constant 80 : index
    %c0_4 = arith.constant 0 : index
    %10 = vector.load %arg1[%c80, %c0_4] : memref<112x128xf32, #tpu.memory_space<vmem>>, vector<16x16xf32>
    %c96 = arith.constant 96 : index
    %c0_5 = arith.constant 0 : index
    %11 = vector.load %arg1[%c96, %c0_5] : memref<112x128xf32, #tpu.memory_space<vmem>>, vector<8x128xf32>
    %12 = vector.extract_strided_slice %11 {offsets = [0, 0], sizes = [1, 32], strides = [1, 1]} : vector<8x128xf32> to vector<1x32xf32>
    %13 = vector.extract_strided_slice %11 {offsets = [1, 0], sizes = [1, 32], strides = [1, 1]} : vector<8x128xf32> to vector<1x32xf32>
    %14 = vector.extract_strided_slice %11 {offsets = [2, 0], sizes = [1, 96], strides = [1, 1]} : vector<8x128xf32> to vector<1x96xf32>
    %15 = vector.extract_strided_slice %11 {offsets = [3, 0], sizes = [1, 32], strides = [1, 1]} : vector<8x128xf32> to vector<1x32xf32>
    %16 = vector.extract_strided_slice %11 {offsets = [4, 0], sizes = [1, 32], strides = [1, 1]} : vector<8x128xf32> to vector<1x32xf32>
    %17 = vector.extract_strided_slice %11 {offsets = [5, 0], sizes = [1, 32], strides = [1, 1]} : vector<8x128xf32> to vector<1x32xf32>
    %18 = vector.extract_strided_slice %11 {offsets = [6, 0], sizes = [1, 64], strides = [1, 1]} : vector<8x128xf32> to vector<1x64xf32>
    %19 = vector.extract_strided_slice %11 {offsets = [7, 0], sizes = [1, 32], strides = [1, 1]} : vector<8x128xf32> to vector<1x32xf32>
    %c0_6 = arith.constant 0 : index
    %c0_7 = arith.constant 0 : index
    %20 = vector.load %arg2[%c0_6, %c0_7] : memref<320x128xbf16, #tpu.memory_space<vmem>>, vector<32x96xbf16>
    %c32 = arith.constant 32 : index
    %c0_8 = arith.constant 0 : index
    %21 = vector.load %arg2[%c32, %c0_8] : memref<320x128xbf16, #tpu.memory_space<vmem>>, vector<32x32xbf16>
    %c64_9 = arith.constant 64 : index
    %c0_10 = arith.constant 0 : index
    %22 = vector.load %arg2[%c64_9, %c0_10] : memref<320x128xbf16, #tpu.memory_space<vmem>>, vector<32x64xbf16>
    %c96_11 = arith.constant 96 : index
    %c0_12 = arith.constant 0 : index
    %23 = vector.load %arg2[%c96_11, %c0_12] : memref<320x128xbf16, #tpu.memory_space<vmem>>, vector<64x32xbf16>
    %cst_13 = arith.constant dense<0.000000e+00> : vector<16xf32>
    %24 = vector.multi_reduction <add>, %9, %cst_13 [1] : vector<16x32xf32> to vector<16xf32>
    %25 = vector.shape_cast %24 : vector<16xf32> to vector<16x1xf32>
    %cst_14 = arith.constant 3.200000e+01 : f32
    %26 = vector.broadcast %cst_14 : f32 to vector<16x1xf32>
    %27 = arith.divf %25, %26 : vector<16x1xf32>
    %28 = vector.broadcast %27 : vector<16x1xf32> to vector<16x32xf32>
    %29 = arith.subf %9, %28 : vector<16x32xf32>
    %30 = arith.mulf %29, %29 : vector<16x32xf32>
    %cst_15 = arith.constant dense<0.000000e+00> : vector<16xf32>
    %31 = vector.multi_reduction <add>, %30, %cst_15 [1] : vector<16x32xf32> to vector<16xf32>
    %32 = vector.shape_cast %31 : vector<16xf32> to vector<16x1xf32>
    %cst_16 = arith.constant 3.200000e+01 : f32
    %33 = vector.broadcast %cst_16 : f32 to vector<16x1xf32>
    %34 = arith.divf %32, %33 : vector<16x1xf32>
    %cst_17 = arith.constant 9.99999974E-6 : f32
    %35 = vector.broadcast %cst_17 : f32 to vector<16x1xf32>
    %36 = arith.addf %34, %35 : vector<16x1xf32>
    %37 = math.rsqrt %36 : vector<16x1xf32>
    %38 = vector.broadcast %37 : vector<16x1xf32> to vector<16x32xf32>
    %39 = arith.mulf %29, %38 : vector<16x32xf32>
    %40 = vector.broadcast %12 : vector<1x32xf32> to vector<16x32xf32>
    %41 = arith.mulf %39, %40 : vector<16x32xf32>
    %42 = vector.broadcast %13 : vector<1x32xf32> to vector<16x32xf32>
    %43 = arith.addf %41, %42 : vector<16x32xf32>
    %44 = arith.truncf %43 : vector<16x32xf32> to vector<16x32xbf16>
    %cst_18 = arith.constant dense<0.000000e+00> : vector<16x96xf32>
    %45 = tpu.matmul %44, %20, %cst_18 {dimension_numbers = #tpu.dot_dimension_numbers<[1], [0], [0], [1], [0, 0, 1, 1], [], []>} : vector<16x32xbf16>, vector<32x96xbf16>, vector<16x96xf32> -> vector<16x96xf32>
    %46 = vector.broadcast %14 : vector<1x96xf32> to vector<16x96xf32>
    %47 = arith.addf %45, %46 : vector<16x96xf32>
    %48 = arith.truncf %47 : vector<16x96xf32> to vector<16x96xbf16>
    %49 = vector.extract_strided_slice %48 {offsets = [0, 0], sizes = [16, 8], strides = [1, 1]} : vector<16x96xbf16> to vector<16x8xbf16>
    %50 = vector.extract_strided_slice %48 {offsets = [0, 32], sizes = [16, 8], strides = [1, 1]} : vector<16x96xbf16> to vector<16x8xbf16>
    %51 = vector.extract_strided_slice %48 {offsets = [0, 64], sizes = [16, 8], strides = [1, 1]} : vector<16x96xbf16> to vector<16x8xbf16>
    %cst_19 = arith.constant dense<0.000000e+00> : vector<16x16xf32>
    %52 = tpu.matmul %49, %50, %cst_19 {dimension_numbers = #tpu.dot_dimension_numbers<[1], [1], [0], [0], [0, 0, 1, 0], [], []>} : vector<16x8xbf16>, vector<16x8xbf16>, vector<16x16xf32> -> vector<16x16xf32>
    %53 = arith.addf %52, %10 : vector<16x16xf32>
    %cst_20 = arith.constant dense<0xFF800000> : vector<16xf32>
    %54 = vector.multi_reduction <maximumf>, %53, %cst_20 [1] : vector<16x16xf32> to vector<16xf32>
    %55 = vector.shape_cast %54 : vector<16xf32> to vector<16x1xf32>
    %56 = vector.broadcast %55 : vector<16x1xf32> to vector<16x16xf32>
    %57 = arith.subf %53, %56 : vector<16x16xf32>
    %58 = math.exp %57 : vector<16x16xf32>
    %cst_21 = arith.constant dense<0.000000e+00> : vector<16xf32>
    %59 = vector.multi_reduction <add>, %58, %cst_21 [1] : vector<16x16xf32> to vector<16xf32>
    %60 = vector.shape_cast %59 : vector<16xf32> to vector<16x1xf32>
    %61 = vector.broadcast %60 : vector<16x1xf32> to vector<16x16xf32>
    %62 = arith.divf %58, %61 : vector<16x16xf32>
    %63 = arith.truncf %62 : vector<16x16xf32> to vector<16x16xbf16>
    %cst_22 = arith.constant dense<0.000000e+00> : vector<16x8xf32>
    %64 = tpu.matmul %63, %51, %cst_22 {dimension_numbers = #tpu.dot_dimension_numbers<[1], [0], [0], [1], [0, 0, 1, 1], [], []>} : vector<16x16xbf16>, vector<16x8xbf16>, vector<16x8xf32> -> vector<16x8xf32>
    %65 = vector.extract_strided_slice %48 {offsets = [0, 8], sizes = [16, 8], strides = [1, 1]} : vector<16x96xbf16> to vector<16x8xbf16>
    %66 = vector.extract_strided_slice %48 {offsets = [0, 40], sizes = [16, 8], strides = [1, 1]} : vector<16x96xbf16> to vector<16x8xbf16>
    %67 = vector.extract_strided_slice %48 {offsets = [0, 72], sizes = [16, 8], strides = [1, 1]} : vector<16x96xbf16> to vector<16x8xbf16>
    %cst_23 = arith.constant dense<0.000000e+00> : vector<16x16xf32>
    %68 = tpu.matmul %65, %66, %cst_23 {dimension_numbers = #tpu.dot_dimension_numbers<[1], [1], [0], [0], [0, 0, 1, 0], [], []>} : vector<16x8xbf16>, vector<16x8xbf16>, vector<16x16xf32> -> vector<16x16xf32>
    %69 = arith.addf %68, %10 : vector<16x16xf32>
    %cst_24 = arith.constant dense<0xFF800000> : vector<16xf32>
    %70 = vector.multi_reduction <maximumf>, %69, %cst_24 [1] : vector<16x16xf32> to vector<16xf32>
    %71 = vector.shape_cast %70 : vector<16xf32> to vector<16x1xf32>
    %72 = vector.broadcast %71 : vector<16x1xf32> to vector<16x16xf32>
    %73 = arith.subf %69, %72 : vector<16x16xf32>
    %74 = math.exp %73 : vector<16x16xf32>
    %cst_25 = arith.constant dense<0.000000e+00> : vector<16xf32>
    %75 = vector.multi_reduction <add>, %74, %cst_25 [1] : vector<16x16xf32> to vector<16xf32>
    %76 = vector.shape_cast %75 : vector<16xf32> to vector<16x1xf32>
    %77 = vector.broadcast %76 : vector<16x1xf32> to vector<16x16xf32>
    %78 = arith.divf %74, %77 : vector<16x16xf32>
    %79 = arith.truncf %78 : vector<16x16xf32> to vector<16x16xbf16>
    %cst_26 = arith.constant dense<0.000000e+00> : vector<16x8xf32>
    %80 = tpu.matmul %79, %67, %cst_26 {dimension_numbers = #tpu.dot_dimension_numbers<[1], [0], [0], [1], [0, 0, 1, 1], [], []>} : vector<16x16xbf16>, vector<16x8xbf16>, vector<16x8xf32> -> vector<16x8xf32>
    %81 = vector.extract_strided_slice %48 {offsets = [0, 16], sizes = [16, 8], strides = [1, 1]} : vector<16x96xbf16> to vector<16x8xbf16>
    %82 = vector.extract_strided_slice %48 {offsets = [0, 48], sizes = [16, 8], strides = [1, 1]} : vector<16x96xbf16> to vector<16x8xbf16>
    %83 = vector.extract_strided_slice %48 {offsets = [0, 80], sizes = [16, 8], strides = [1, 1]} : vector<16x96xbf16> to vector<16x8xbf16>
    %cst_27 = arith.constant dense<0.000000e+00> : vector<16x16xf32>
    %84 = tpu.matmul %81, %82, %cst_27 {dimension_numbers = #tpu.dot_dimension_numbers<[1], [1], [0], [0], [0, 0, 1, 0], [], []>} : vector<16x8xbf16>, vector<16x8xbf16>, vector<16x16xf32> -> vector<16x16xf32>
    %85 = arith.addf %84, %10 : vector<16x16xf32>
    %cst_28 = arith.constant dense<0xFF800000> : vector<16xf32>
    %86 = vector.multi_reduction <maximumf>, %85, %cst_28 [1] : vector<16x16xf32> to vector<16xf32>
    %87 = vector.shape_cast %86 : vector<16xf32> to vector<16x1xf32>
    %88 = vector.broadcast %87 : vector<16x1xf32> to vector<16x16xf32>
    %89 = arith.subf %85, %88 : vector<16x16xf32>
    %90 = math.exp %89 : vector<16x16xf32>
    %cst_29 = arith.constant dense<0.000000e+00> : vector<16xf32>
    %91 = vector.multi_reduction <add>, %90, %cst_29 [1] : vector<16x16xf32> to vector<16xf32>
    %92 = vector.shape_cast %91 : vector<16xf32> to vector<16x1xf32>
    %93 = vector.broadcast %92 : vector<16x1xf32> to vector<16x16xf32>
    %94 = arith.divf %90, %93 : vector<16x16xf32>
    %95 = arith.truncf %94 : vector<16x16xf32> to vector<16x16xbf16>
    %cst_30 = arith.constant dense<0.000000e+00> : vector<16x8xf32>
    %96 = tpu.matmul %95, %83, %cst_30 {dimension_numbers = #tpu.dot_dimension_numbers<[1], [0], [0], [1], [0, 0, 1, 1], [], []>} : vector<16x16xbf16>, vector<16x8xbf16>, vector<16x8xf32> -> vector<16x8xf32>
    %97 = vector.extract_strided_slice %48 {offsets = [0, 24], sizes = [16, 8], strides = [1, 1]} : vector<16x96xbf16> to vector<16x8xbf16>
    %98 = vector.extract_strided_slice %48 {offsets = [0, 56], sizes = [16, 8], strides = [1, 1]} : vector<16x96xbf16> to vector<16x8xbf16>
    %99 = vector.extract_strided_slice %48 {offsets = [0, 88], sizes = [16, 8], strides = [1, 1]} : vector<16x96xbf16> to vector<16x8xbf16>
    %cst_31 = arith.constant dense<0.000000e+00> : vector<16x16xf32>
    %100 = tpu.matmul %97, %98, %cst_31 {dimension_numbers = #tpu.dot_dimension_numbers<[1], [1], [0], [0], [0, 0, 1, 0], [], []>} : vector<16x8xbf16>, vector<16x8xbf16>, vector<16x16xf32> -> vector<16x16xf32>
    %101 = arith.addf %100, %10 : vector<16x16xf32>
    %cst_32 = arith.constant dense<0xFF800000> : vector<16xf32>
    %102 = vector.multi_reduction <maximumf>, %101, %cst_32 [1] : vector<16x16xf32> to vector<16xf32>
    %103 = vector.shape_cast %102 : vector<16xf32> to vector<16x1xf32>
    %104 = vector.broadcast %103 : vector<16x1xf32> to vector<16x16xf32>
    %105 = arith.subf %101, %104 : vector<16x16xf32>
    %106 = math.exp %105 : vector<16x16xf32>
    %cst_33 = arith.constant dense<0.000000e+00> : vector<16xf32>
    %107 = vector.multi_reduction <add>, %106, %cst_33 [1] : vector<16x16xf32> to vector<16xf32>
    %108 = vector.shape_cast %107 : vector<16xf32> to vector<16x1xf32>
    %109 = vector.broadcast %108 : vector<16x1xf32> to vector<16x16xf32>
    %110 = arith.divf %106, %109 : vector<16x16xf32>
    %111 = arith.truncf %110 : vector<16x16xf32> to vector<16x16xbf16>
    %cst_34 = arith.constant dense<0.000000e+00> : vector<16x8xf32>
    %112 = tpu.matmul %111, %99, %cst_34 {dimension_numbers = #tpu.dot_dimension_numbers<[1], [0], [0], [1], [0, 0, 1, 1], [], []>} : vector<16x16xbf16>, vector<16x8xbf16>, vector<16x8xf32> -> vector<16x8xf32>
    %113 = tpu.concatenate %64, %80, %96, %112 in 1 : vector<16x8xf32>, vector<16x8xf32>, vector<16x8xf32>, vector<16x8xf32> -> vector<16x32xf32>
    %114 = arith.truncf %113 : vector<16x32xf32> to vector<16x32xbf16>
    %cst_35 = arith.constant dense<0.000000e+00> : vector<16x32xf32>
    %115 = tpu.matmul %114, %21, %cst_35 {dimension_numbers = #tpu.dot_dimension_numbers<[1], [0], [0], [1], [0, 0, 1, 1], [], []>} : vector<16x32xbf16>, vector<32x32xbf16>, vector<16x32xf32> -> vector<16x32xf32>
    %116 = vector.broadcast %15 : vector<1x32xf32> to vector<16x32xf32>
    %117 = arith.addf %115, %116 : vector<16x32xf32>
    %118 = arith.addf %9, %117 : vector<16x32xf32>
    %cst_36 = arith.constant dense<0.000000e+00> : vector<16xf32>
    %119 = vector.multi_reduction <add>, %118, %cst_36 [1] : vector<16x32xf32> to vector<16xf32>
    %120 = vector.shape_cast %119 : vector<16xf32> to vector<16x1xf32>
    %cst_37 = arith.constant 3.200000e+01 : f32
    %121 = vector.broadcast %cst_37 : f32 to vector<16x1xf32>
    %122 = arith.divf %120, %121 : vector<16x1xf32>
    %123 = vector.broadcast %122 : vector<16x1xf32> to vector<16x32xf32>
    %124 = arith.subf %118, %123 : vector<16x32xf32>
    %125 = arith.mulf %124, %124 : vector<16x32xf32>
    %cst_38 = arith.constant dense<0.000000e+00> : vector<16xf32>
    %126 = vector.multi_reduction <add>, %125, %cst_38 [1] : vector<16x32xf32> to vector<16xf32>
    %127 = vector.shape_cast %126 : vector<16xf32> to vector<16x1xf32>
    %cst_39 = arith.constant 3.200000e+01 : f32
    %128 = vector.broadcast %cst_39 : f32 to vector<16x1xf32>
    %129 = arith.divf %127, %128 : vector<16x1xf32>
    %cst_40 = arith.constant 9.99999974E-6 : f32
    %130 = vector.broadcast %cst_40 : f32 to vector<16x1xf32>
    %131 = arith.addf %129, %130 : vector<16x1xf32>
    %132 = math.rsqrt %131 : vector<16x1xf32>
    %133 = vector.broadcast %132 : vector<16x1xf32> to vector<16x32xf32>
    %134 = arith.mulf %124, %133 : vector<16x32xf32>
    %135 = vector.broadcast %16 : vector<1x32xf32> to vector<16x32xf32>
    %136 = arith.mulf %134, %135 : vector<16x32xf32>
    %137 = vector.broadcast %17 : vector<1x32xf32> to vector<16x32xf32>
    %138 = arith.addf %136, %137 : vector<16x32xf32>
    %139 = arith.truncf %138 : vector<16x32xf32> to vector<16x32xbf16>
    %cst_41 = arith.constant dense<0.000000e+00> : vector<16x64xf32>
    %140 = tpu.matmul %139, %22, %cst_41 {dimension_numbers = #tpu.dot_dimension_numbers<[1], [0], [0], [1], [0, 0, 1, 1], [], []>} : vector<16x32xbf16>, vector<32x64xbf16>, vector<16x64xf32> -> vector<16x64xf32>
    %141 = vector.broadcast %18 : vector<1x64xf32> to vector<16x64xf32>
    %142 = arith.addf %140, %141 : vector<16x64xf32>
    %cst_42 = arith.constant 5.000000e-01 : f32
    %143 = vector.broadcast %cst_42 : f32 to vector<16x64xf32>
    %144 = arith.mulf %143, %142 : vector<16x64xf32>
    %cst_43 = arith.constant 4.471500e-02 : f32
    %145 = vector.broadcast %cst_43 : f32 to vector<16x64xf32>
    %146 = arith.mulf %145, %142 : vector<16x64xf32>
    %147 = arith.mulf %146, %142 : vector<16x64xf32>
    %148 = arith.mulf %147, %142 : vector<16x64xf32>
    %149 = arith.addf %142, %148 : vector<16x64xf32>
    %cst_44 = arith.constant 0.797884583 : f32
    %150 = vector.broadcast %cst_44 : f32 to vector<16x64xf32>
    %151 = arith.mulf %150, %149 : vector<16x64xf32>
    %152 = math.tanh %151 : vector<16x64xf32>
    %cst_45 = arith.constant 1.000000e+00 : f32
    %153 = vector.broadcast %cst_45 : f32 to vector<16x64xf32>
    %154 = arith.addf %153, %152 : vector<16x64xf32>
    %155 = arith.mulf %144, %154 : vector<16x64xf32>
    %156 = arith.truncf %155 : vector<16x64xf32> to vector<16x64xbf16>
    %cst_46 = arith.constant dense<0.000000e+00> : vector<16x32xf32>
    %157 = tpu.matmul %156, %23, %cst_46 {dimension_numbers = #tpu.dot_dimension_numbers<[1], [0], [0], [1], [0, 0, 1, 1], [], []>} : vector<16x64xbf16>, vector<64x32xbf16>, vector<16x32xf32> -> vector<16x32xf32>
    %158 = vector.broadcast %19 : vector<1x32xf32> to vector<16x32xf32>
    %159 = arith.addf %157, %158 : vector<16x32xf32>
    %160 = arith.addf %118, %159 : vector<16x32xf32>
    %c104 = arith.constant 104 : index
    %c0_47 = arith.constant 0 : index
    %161 = vector.load %arg1[%c104, %c0_47] : memref<112x128xf32, #tpu.memory_space<vmem>>, vector<8x128xf32>
    %162 = vector.extract_strided_slice %161 {offsets = [0, 0], sizes = [1, 32], strides = [1, 1]} : vector<8x128xf32> to vector<1x32xf32>
    %163 = vector.extract_strided_slice %161 {offsets = [1, 0], sizes = [1, 32], strides = [1, 1]} : vector<8x128xf32> to vector<1x32xf32>
    %164 = vector.extract_strided_slice %161 {offsets = [2, 0], sizes = [1, 96], strides = [1, 1]} : vector<8x128xf32> to vector<1x96xf32>
    %165 = vector.extract_strided_slice %161 {offsets = [3, 0], sizes = [1, 32], strides = [1, 1]} : vector<8x128xf32> to vector<1x32xf32>
    %166 = vector.extract_strided_slice %161 {offsets = [4, 0], sizes = [1, 32], strides = [1, 1]} : vector<8x128xf32> to vector<1x32xf32>
    %167 = vector.extract_strided_slice %161 {offsets = [5, 0], sizes = [1, 32], strides = [1, 1]} : vector<8x128xf32> to vector<1x32xf32>
    %168 = vector.extract_strided_slice %161 {offsets = [6, 0], sizes = [1, 64], strides = [1, 1]} : vector<8x128xf32> to vector<1x64xf32>
    %169 = vector.extract_strided_slice %161 {offsets = [7, 0], sizes = [1, 32], strides = [1, 1]} : vector<8x128xf32> to vector<1x32xf32>
    %c160 = arith.constant 160 : index
    %c0_48 = arith.constant 0 : index
    %170 = vector.load %arg2[%c160, %c0_48] : memref<320x128xbf16, #tpu.memory_space<vmem>>, vector<32x96xbf16>
    %c192 = arith.constant 192 : index
    %c0_49 = arith.constant 0 : index
    %171 = vector.load %arg2[%c192, %c0_49] : memref<320x128xbf16, #tpu.memory_space<vmem>>, vector<32x32xbf16>
    %c224 = arith.constant 224 : index
    %c0_50 = arith.constant 0 : index
    %172 = vector.load %arg2[%c224, %c0_50] : memref<320x128xbf16, #tpu.memory_space<vmem>>, vector<32x64xbf16>
    %c256 = arith.constant 256 : index
    %c0_51 = arith.constant 0 : index
    %173 = vector.load %arg2[%c256, %c0_51] : memref<320x128xbf16, #tpu.memory_space<vmem>>, vector<64x32xbf16>
    %cst_52 = arith.constant dense<0.000000e+00> : vector<16xf32>
    %174 = vector.multi_reduction <add>, %160, %cst_52 [1] : vector<16x32xf32> to vector<16xf32>
    %175 = vector.shape_cast %174 : vector<16xf32> to vector<16x1xf32>
    %cst_53 = arith.constant 3.200000e+01 : f32
    %176 = vector.broadcast %cst_53 : f32 to vector<16x1xf32>
    %177 = arith.divf %175, %176 : vector<16x1xf32>
    %178 = vector.broadcast %177 : vector<16x1xf32> to vector<16x32xf32>
    %179 = arith.subf %160, %178 : vector<16x32xf32>
    %180 = arith.mulf %179, %179 : vector<16x32xf32>
    %cst_54 = arith.constant dense<0.000000e+00> : vector<16xf32>
    %181 = vector.multi_reduction <add>, %180, %cst_54 [1] : vector<16x32xf32> to vector<16xf32>
    %182 = vector.shape_cast %181 : vector<16xf32> to vector<16x1xf32>
    %cst_55 = arith.constant 3.200000e+01 : f32
    %183 = vector.broadcast %cst_55 : f32 to vector<16x1xf32>
    %184 = arith.divf %182, %183 : vector<16x1xf32>
    %cst_56 = arith.constant 9.99999974E-6 : f32
    %185 = vector.broadcast %cst_56 : f32 to vector<16x1xf32>
    %186 = arith.addf %184, %185 : vector<16x1xf32>
    %187 = math.rsqrt %186 : vector<16x1xf32>
    %188 = vector.broadcast %187 : vector<16x1xf32> to vector<16x32xf32>
    %189 = arith.mulf %179, %188 : vector<16x32xf32>
    %190 = vector.broadcast %162 : vector<1x32xf32> to vector<16x32xf32>
    %191 = arith.mulf %189, %190 : vector<16x32xf32>
    %192 = vector.broadcast %163 : vector<1x32xf32> to vector<16x32xf32>
    %193 = arith.addf %191, %192 : vector<16x32xf32>
    %194 = arith.truncf %193 : vector<16x32xf32> to vector<16x32xbf16>
    %cst_57 = arith.constant dense<0.000000e+00> : vector<16x96xf32>
    %195 = tpu.matmul %194, %170, %cst_57 {dimension_numbers = #tpu.dot_dimension_numbers<[1], [0], [0], [1], [0, 0, 1, 1], [], []>} : vector<16x32xbf16>, vector<32x96xbf16>, vector<16x96xf32> -> vector<16x96xf32>
    %196 = vector.broadcast %164 : vector<1x96xf32> to vector<16x96xf32>
    %197 = arith.addf %195, %196 : vector<16x96xf32>
    %198 = arith.truncf %197 : vector<16x96xf32> to vector<16x96xbf16>
    %199 = vector.extract_strided_slice %198 {offsets = [0, 0], sizes = [16, 8], strides = [1, 1]} : vector<16x96xbf16> to vector<16x8xbf16>
    %200 = vector.extract_strided_slice %198 {offsets = [0, 32], sizes = [16, 8], strides = [1, 1]} : vector<16x96xbf16> to vector<16x8xbf16>
    %201 = vector.extract_strided_slice %198 {offsets = [0, 64], sizes = [16, 8], strides = [1, 1]} : vector<16x96xbf16> to vector<16x8xbf16>
    %cst_58 = arith.constant dense<0.000000e+00> : vector<16x16xf32>
    %202 = tpu.matmul %199, %200, %cst_58 {dimension_numbers = #tpu.dot_dimension_numbers<[1], [1], [0], [0], [0, 0, 1, 0], [], []>} : vector<16x8xbf16>, vector<16x8xbf16>, vector<16x16xf32> -> vector<16x16xf32>
    %203 = arith.addf %202, %10 : vector<16x16xf32>
    %cst_59 = arith.constant dense<0xFF800000> : vector<16xf32>
    %204 = vector.multi_reduction <maximumf>, %203, %cst_59 [1] : vector<16x16xf32> to vector<16xf32>
    %205 = vector.shape_cast %204 : vector<16xf32> to vector<16x1xf32>
    %206 = vector.broadcast %205 : vector<16x1xf32> to vector<16x16xf32>
    %207 = arith.subf %203, %206 : vector<16x16xf32>
    %208 = math.exp %207 : vector<16x16xf32>
    %cst_60 = arith.constant dense<0.000000e+00> : vector<16xf32>
    %209 = vector.multi_reduction <add>, %208, %cst_60 [1] : vector<16x16xf32> to vector<16xf32>
    %210 = vector.shape_cast %209 : vector<16xf32> to vector<16x1xf32>
    %211 = vector.broadcast %210 : vector<16x1xf32> to vector<16x16xf32>
    %212 = arith.divf %208, %211 : vector<16x16xf32>
    %213 = arith.truncf %212 : vector<16x16xf32> to vector<16x16xbf16>
    %cst_61 = arith.constant dense<0.000000e+00> : vector<16x8xf32>
    %214 = tpu.matmul %213, %201, %cst_61 {dimension_numbers = #tpu.dot_dimension_numbers<[1], [0], [0], [1], [0, 0, 1, 1], [], []>} : vector<16x16xbf16>, vector<16x8xbf16>, vector<16x8xf32> -> vector<16x8xf32>
    %215 = vector.extract_strided_slice %198 {offsets = [0, 8], sizes = [16, 8], strides = [1, 1]} : vector<16x96xbf16> to vector<16x8xbf16>
    %216 = vector.extract_strided_slice %198 {offsets = [0, 40], sizes = [16, 8], strides = [1, 1]} : vector<16x96xbf16> to vector<16x8xbf16>
    %217 = vector.extract_strided_slice %198 {offsets = [0, 72], sizes = [16, 8], strides = [1, 1]} : vector<16x96xbf16> to vector<16x8xbf16>
    %cst_62 = arith.constant dense<0.000000e+00> : vector<16x16xf32>
    %218 = tpu.matmul %215, %216, %cst_62 {dimension_numbers = #tpu.dot_dimension_numbers<[1], [1], [0], [0], [0, 0, 1, 0], [], []>} : vector<16x8xbf16>, vector<16x8xbf16>, vector<16x16xf32> -> vector<16x16xf32>
    %219 = arith.addf %218, %10 : vector<16x16xf32>
    %cst_63 = arith.constant dense<0xFF800000> : vector<16xf32>
    %220 = vector.multi_reduction <maximumf>, %219, %cst_63 [1] : vector<16x16xf32> to vector<16xf32>
    %221 = vector.shape_cast %220 : vector<16xf32> to vector<16x1xf32>
    %222 = vector.broadcast %221 : vector<16x1xf32> to vector<16x16xf32>
    %223 = arith.subf %219, %222 : vector<16x16xf32>
    %224 = math.exp %223 : vector<16x16xf32>
    %cst_64 = arith.constant dense<0.000000e+00> : vector<16xf32>
    %225 = vector.multi_reduction <add>, %224, %cst_64 [1] : vector<16x16xf32> to vector<16xf32>
    %226 = vector.shape_cast %225 : vector<16xf32> to vector<16x1xf32>
    %227 = vector.broadcast %226 : vector<16x1xf32> to vector<16x16xf32>
    %228 = arith.divf %224, %227 : vector<16x16xf32>
    %229 = arith.truncf %228 : vector<16x16xf32> to vector<16x16xbf16>
    %cst_65 = arith.constant dense<0.000000e+00> : vector<16x8xf32>
    %230 = tpu.matmul %229, %217, %cst_65 {dimension_numbers = #tpu.dot_dimension_numbers<[1], [0], [0], [1], [0, 0, 1, 1], [], []>} : vector<16x16xbf16>, vector<16x8xbf16>, vector<16x8xf32> -> vector<16x8xf32>
    %231 = vector.extract_strided_slice %198 {offsets = [0, 16], sizes = [16, 8], strides = [1, 1]} : vector<16x96xbf16> to vector<16x8xbf16>
    %232 = vector.extract_strided_slice %198 {offsets = [0, 48], sizes = [16, 8], strides = [1, 1]} : vector<16x96xbf16> to vector<16x8xbf16>
    %233 = vector.extract_strided_slice %198 {offsets = [0, 80], sizes = [16, 8], strides = [1, 1]} : vector<16x96xbf16> to vector<16x8xbf16>
    %cst_66 = arith.constant dense<0.000000e+00> : vector<16x16xf32>
    %234 = tpu.matmul %231, %232, %cst_66 {dimension_numbers = #tpu.dot_dimension_numbers<[1], [1], [0], [0], [0, 0, 1, 0], [], []>} : vector<16x8xbf16>, vector<16x8xbf16>, vector<16x16xf32> -> vector<16x16xf32>
    %235 = arith.addf %234, %10 : vector<16x16xf32>
    %cst_67 = arith.constant dense<0xFF800000> : vector<16xf32>
    %236 = vector.multi_reduction <maximumf>, %235, %cst_67 [1] : vector<16x16xf32> to vector<16xf32>
    %237 = vector.shape_cast %236 : vector<16xf32> to vector<16x1xf32>
    %238 = vector.broadcast %237 : vector<16x1xf32> to vector<16x16xf32>
    %239 = arith.subf %235, %238 : vector<16x16xf32>
    %240 = math.exp %239 : vector<16x16xf32>
    %cst_68 = arith.constant dense<0.000000e+00> : vector<16xf32>
    %241 = vector.multi_reduction <add>, %240, %cst_68 [1] : vector<16x16xf32> to vector<16xf32>
    %242 = vector.shape_cast %241 : vector<16xf32> to vector<16x1xf32>
    %243 = vector.broadcast %242 : vector<16x1xf32> to vector<16x16xf32>
    %244 = arith.divf %240, %243 : vector<16x16xf32>
    %245 = arith.truncf %244 : vector<16x16xf32> to vector<16x16xbf16>
    %cst_69 = arith.constant dense<0.000000e+00> : vector<16x8xf32>
    %246 = tpu.matmul %245, %233, %cst_69 {dimension_numbers = #tpu.dot_dimension_numbers<[1], [0], [0], [1], [0, 0, 1, 1], [], []>} : vector<16x16xbf16>, vector<16x8xbf16>, vector<16x8xf32> -> vector<16x8xf32>
    %247 = vector.extract_strided_slice %198 {offsets = [0, 24], sizes = [16, 8], strides = [1, 1]} : vector<16x96xbf16> to vector<16x8xbf16>
    %248 = vector.extract_strided_slice %198 {offsets = [0, 56], sizes = [16, 8], strides = [1, 1]} : vector<16x96xbf16> to vector<16x8xbf16>
    %249 = vector.extract_strided_slice %198 {offsets = [0, 88], sizes = [16, 8], strides = [1, 1]} : vector<16x96xbf16> to vector<16x8xbf16>
    %cst_70 = arith.constant dense<0.000000e+00> : vector<16x16xf32>
    %250 = tpu.matmul %247, %248, %cst_70 {dimension_numbers = #tpu.dot_dimension_numbers<[1], [1], [0], [0], [0, 0, 1, 0], [], []>} : vector<16x8xbf16>, vector<16x8xbf16>, vector<16x16xf32> -> vector<16x16xf32>
    %251 = arith.addf %250, %10 : vector<16x16xf32>
    %cst_71 = arith.constant dense<0xFF800000> : vector<16xf32>
    %252 = vector.multi_reduction <maximumf>, %251, %cst_71 [1] : vector<16x16xf32> to vector<16xf32>
    %253 = vector.shape_cast %252 : vector<16xf32> to vector<16x1xf32>
    %254 = vector.broadcast %253 : vector<16x1xf32> to vector<16x16xf32>
    %255 = arith.subf %251, %254 : vector<16x16xf32>
    %256 = math.exp %255 : vector<16x16xf32>
    %cst_72 = arith.constant dense<0.000000e+00> : vector<16xf32>
    %257 = vector.multi_reduction <add>, %256, %cst_72 [1] : vector<16x16xf32> to vector<16xf32>
    %258 = vector.shape_cast %257 : vector<16xf32> to vector<16x1xf32>
    %259 = vector.broadcast %258 : vector<16x1xf32> to vector<16x16xf32>
    %260 = arith.divf %256, %259 : vector<16x16xf32>
    %261 = arith.truncf %260 : vector<16x16xf32> to vector<16x16xbf16>
    %cst_73 = arith.constant dense<0.000000e+00> : vector<16x8xf32>
    %262 = tpu.matmul %261, %249, %cst_73 {dimension_numbers = #tpu.dot_dimension_numbers<[1], [0], [0], [1], [0, 0, 1, 1], [], []>} : vector<16x16xbf16>, vector<16x8xbf16>, vector<16x8xf32> -> vector<16x8xf32>
    %263 = tpu.concatenate %214, %230, %246, %262 in 1 : vector<16x8xf32>, vector<16x8xf32>, vector<16x8xf32>, vector<16x8xf32> -> vector<16x32xf32>
    %264 = arith.truncf %263 : vector<16x32xf32> to vector<16x32xbf16>
    %cst_74 = arith.constant dense<0.000000e+00> : vector<16x32xf32>
    %265 = tpu.matmul %264, %171, %cst_74 {dimension_numbers = #tpu.dot_dimension_numbers<[1], [0], [0], [1], [0, 0, 1, 1], [], []>} : vector<16x32xbf16>, vector<32x32xbf16>, vector<16x32xf32> -> vector<16x32xf32>
    %266 = vector.broadcast %165 : vector<1x32xf32> to vector<16x32xf32>
    %267 = arith.addf %265, %266 : vector<16x32xf32>
    %268 = arith.addf %160, %267 : vector<16x32xf32>
    %cst_75 = arith.constant dense<0.000000e+00> : vector<16xf32>
    %269 = vector.multi_reduction <add>, %268, %cst_75 [1] : vector<16x32xf32> to vector<16xf32>
    %270 = vector.shape_cast %269 : vector<16xf32> to vector<16x1xf32>
    %cst_76 = arith.constant 3.200000e+01 : f32
    %271 = vector.broadcast %cst_76 : f32 to vector<16x1xf32>
    %272 = arith.divf %270, %271 : vector<16x1xf32>
    %273 = vector.broadcast %272 : vector<16x1xf32> to vector<16x32xf32>
    %274 = arith.subf %268, %273 : vector<16x32xf32>
    %275 = arith.mulf %274, %274 : vector<16x32xf32>
    %cst_77 = arith.constant dense<0.000000e+00> : vector<16xf32>
    %276 = vector.multi_reduction <add>, %275, %cst_77 [1] : vector<16x32xf32> to vector<16xf32>
    %277 = vector.shape_cast %276 : vector<16xf32> to vector<16x1xf32>
    %cst_78 = arith.constant 3.200000e+01 : f32
    %278 = vector.broadcast %cst_78 : f32 to vector<16x1xf32>
    %279 = arith.divf %277, %278 : vector<16x1xf32>
    %cst_79 = arith.constant 9.99999974E-6 : f32
    %280 = vector.broadcast %cst_79 : f32 to vector<16x1xf32>
    %281 = arith.addf %279, %280 : vector<16x1xf32>
    %282 = math.rsqrt %281 : vector<16x1xf32>
    %283 = vector.broadcast %282 : vector<16x1xf32> to vector<16x32xf32>
    %284 = arith.mulf %274, %283 : vector<16x32xf32>
    %285 = vector.broadcast %166 : vector<1x32xf32> to vector<16x32xf32>
    %286 = arith.mulf %284, %285 : vector<16x32xf32>
    %287 = vector.broadcast %167 : vector<1x32xf32> to vector<16x32xf32>
    %288 = arith.addf %286, %287 : vector<16x32xf32>
    %289 = arith.truncf %288 : vector<16x32xf32> to vector<16x32xbf16>
    %cst_80 = arith.constant dense<0.000000e+00> : vector<16x64xf32>
    %290 = tpu.matmul %289, %172, %cst_80 {dimension_numbers = #tpu.dot_dimension_numbers<[1], [0], [0], [1], [0, 0, 1, 1], [], []>} : vector<16x32xbf16>, vector<32x64xbf16>, vector<16x64xf32> -> vector<16x64xf32>
    %291 = vector.broadcast %168 : vector<1x64xf32> to vector<16x64xf32>
    %292 = arith.addf %290, %291 : vector<16x64xf32>
    %cst_81 = arith.constant 5.000000e-01 : f32
    %293 = vector.broadcast %cst_81 : f32 to vector<16x64xf32>
    %294 = arith.mulf %293, %292 : vector<16x64xf32>
    %cst_82 = arith.constant 4.471500e-02 : f32
    %295 = vector.broadcast %cst_82 : f32 to vector<16x64xf32>
    %296 = arith.mulf %295, %292 : vector<16x64xf32>
    %297 = arith.mulf %296, %292 : vector<16x64xf32>
    %298 = arith.mulf %297, %292 : vector<16x64xf32>
    %299 = arith.addf %292, %298 : vector<16x64xf32>
    %cst_83 = arith.constant 0.797884583 : f32
    %300 = vector.broadcast %cst_83 : f32 to vector<16x64xf32>
    %301 = arith.mulf %300, %299 : vector<16x64xf32>
    %302 = math.tanh %301 : vector<16x64xf32>
    %cst_84 = arith.constant 1.000000e+00 : f32
    %303 = vector.broadcast %cst_84 : f32 to vector<16x64xf32>
    %304 = arith.addf %303, %302 : vector<16x64xf32>
    %305 = arith.mulf %294, %304 : vector<16x64xf32>
    %306 = arith.truncf %305 : vector<16x64xf32> to vector<16x64xbf16>
    %cst_85 = arith.constant dense<0.000000e+00> : vector<16x32xf32>
    %307 = tpu.matmul %306, %173, %cst_85 {dimension_numbers = #tpu.dot_dimension_numbers<[1], [0], [0], [1], [0, 0, 1, 1], [], []>} : vector<16x64xbf16>, vector<64x32xbf16>, vector<16x32xf32> -> vector<16x32xf32>
    %308 = vector.broadcast %169 : vector<1x32xf32> to vector<16x32xf32>
    %309 = arith.addf %307, %308 : vector<16x32xf32>
    %310 = arith.addf %268, %309 : vector<16x32xf32>
    %311 = tpu.concatenate %310, %160 in 0 : vector<16x32xf32>, vector<16x32xf32> -> vector<32x32xf32>
    %c0_86 = arith.constant 0 : index
    %c0_87 = arith.constant 0 : index
    %312 = vector.load %arg3[%c0_86, %c0_87] : memref<32x32xf32, #tpu.memory_space<vmem>>, vector<32x32xf32>
    tpu.vector_store %arg3[%c0_86, %c0_87], %311 {strides = array<i32>} : memref<32x32xf32, #tpu.memory_space<vmem>>, vector<32x32xf32>,
    return
  }
}

</mosaic_0001>

<llo_original>
// kernel: _fused_forward.1
$region0: #{_fused_forward.1}
  #allocation0 [shape = 'u32[]', space=smem, size = 0x4, offset = 0x4, fixed_abs, tag = 'smem constant byte address 0x4 - core index']
  #allocation1 [shape = 'u32[144,128]{1,0:T(1,128)}', space=vmem, size = 0x12000, scoped, tag = 'internal scratch']
  %s0 = inlined_call_operand.vmem [shape: s32[16,1], index: 0, kind: input, shape index: {}]
  %s1 = inlined_call_operand.hbm [shape: f32[112,128], index: 1, kind: input, shape index: {}]
  %s2 = inlined_call_operand.hbm [shape: bf16[320,128], index: 2, kind: input, shape index: {}]
  %s3 = inlined_call_operand.vmem [shape: f32[32,32], index: 3, kind: output, shape index: {}]
  %s4 = sld [smem:[#allocation0]]
  $region30: #{_fused_forward.1} parent=0
    _
  %s6 = ssub.s32 1, %s4
  %s7 = scalar_select 0, %s6, %s4
  $region1: #{_fused_forward.1} parent=0
    #allocation2 [shape = 'u8[57344]{0}', space=vmem, size = 0xe000, scoped, tag = 'input window, operand 1, single buffered']
    #allocation3 [shape = 's32[1]{0}', space=sflag, size = 0x4, scoped, tag = 'scoped memory for _fused_forward.1']
    #allocation4 [shape = 'u8[81920]{0}', space=vmem, size = 0x14000, scoped, tag = 'input window, operand 2, single buffered']
    #allocation5 [shape = 's32[1]{0}', space=sflag, size = 0x4, scoped, tag = 'scoped memory for _fused_forward.1']
    %8 = vsyncpa [#allocation3], 0
    %9 = vsyncpa [#allocation5], 0
    // Predicated region
    $region2: #{_fused_forward.1} parent=1 // pred_check
      _
    $region3: #{_fused_forward.1} parent=1 // pred_check_branch
      %11 = sbr.rel (0) target = $region5
    $region4: #{_fused_forward.1} parent=1 // pred_region
      _
    $region5: #{_fused_forward.1} parent=1 // pred_fallthru
      _
    // Predicated region
    $region6: #{_fused_forward.1} parent=1 // pred_check
      _
    $region7: #{_fused_forward.1} parent=1 // pred_check_branch
      %13 = sbr.rel (0) target = $region9
    $region8: #{_fused_forward.1} parent=1 // pred_region
      %s15 = ssub.s32 1792, 1792
      %16 = vsyncadd [#allocation3], %s15
      %s17 = sshll.u32 [#allocation2], 4
      %s18 = int_to_ptr.vmem [resolvable:$true] %s17
      %23 = dma.hbm_to_vmem [thread:$0]  %s1, 1792, %s18, [#allocation3], 128, 128, 8
    $region9: #{_fused_forward.1} parent=1 // pred_fallthru
      _
    // Predicated region
    $region10: #{_fused_forward.1} parent=1 // pred_check
      _
    $region11: #{_fused_forward.1} parent=1 // pred_check_branch
      %25 = sbr.rel (0) target = $region13
    $region12: #{_fused_forward.1} parent=1 // pred_region
      %s27 = ssub.s32 2560, 2560
      %28 = vsyncadd [#allocation5], %s27
      %s29 = sshll.u32 [#allocation4], 4
      %s30 = int_to_ptr.vmem [resolvable:$true] %s29
      %35 = dma.hbm_to_vmem [thread:$0]  %s2, 2560, %s30, [#allocation5], 64, 64, 4
    $region13: #{_fused_forward.1} parent=1 // pred_fallthru
      _
    // Predicated region
    $region14: #{_fused_forward.1} parent=1 // pred_check
      _
    $region15: #{_fused_forward.1} parent=1 // pred_check_branch
      %37 = sbr.rel (0) target = $region17
    $region16: #{_fused_forward.1} parent=1 // pred_region
      %38 = dma.done [#allocation3], 1792
    $region17: #{_fused_forward.1} parent=1 // pred_fallthru
      _
    // Predicated region
    $region18: #{_fused_forward.1} parent=1 // pred_check
      _
    $region19: #{_fused_forward.1} parent=1 // pred_check_branch
      %40 = sbr.rel (0) target = $region21
    $region20: #{_fused_forward.1} parent=1 // pred_region
      %41 = dma.done [#allocation5], 2560
    $region21: #{_fused_forward.1} parent=1 // pred_fallthru
      _
    %v43 = vld [vmem:[%s0] sm:$0xff]
    %v44 = vld [vmem:[%s0 + $0x8] sm:$0xff]
    %v45 = vlaneseq
    %v46 = vand.u32 %v45, 127
    %47 = vset.pattern.permute.xlu0 0
    %48 = vperm.xlu0 %47, %v43
    %v49 = vpop.permute.xlu0 %48
    %50 = vset.pattern.permute.xlu0 0
    %51 = vperm.xlu0 %50, %v44
    %v52 = vpop.permute.xlu0 %51
    %vm53 = vcmp.eq.s32.totalorder %v46, %v49
    %vm54 = vcmp.eq.s32.totalorder %v46, %v52
    %v55 = vsel %vm53, 1, 0
    %v56 = vsel %vm54, 1, 0
    %v57 = vcvt.s32.f32 %v55
    %v58 = vcvt.s32.f32 %v56
    %v59 = vld [vmem:[#allocation2] sm:$0xff]
    %v60 = vld [vmem:[#allocation2 + $0x8] sm:$0xff]
    %v61 = vld [vmem:[#allocation2 + $0x10] sm:$0xff]
    %v62 = vld [vmem:[#allocation2 + $0x18] sm:$0xff]
    %v63 = vld [vmem:[#allocation2 + $0x20] sm:$0xff]
    %v64 = vld [vmem:[#allocation2 + $0x28] sm:$0xff]
    %v65 = vld [vmem:[#allocation2 + $0x30] sm:$0xff]
    %v66 = vld [vmem:[#allocation2 + $0x38] sm:$0xff]
    %v67 = vld [vmem:[#allocation2 + $0x40] sm:$0xff]
    %v68 = vld [vmem:[#allocation2 + $0x48] sm:$0xff]
    %vm69 = vcmask 523264
    %v71 = vsel %vm69, %v57, 0
    %v74 = vsel %vm69, %v58, 0
    %76 = vmatprep.subr.mxu0 0.0
    %77 = vmatpush1.msra.mxu0 %v59
    %78 = vmatprep.subr.mxu0 0.0
    %79 = vmatpush1.msra.mxu0 %v60
    %80 = vmatprep.subr.mxu0 0.0
    %81 = vmatpush1.msra.mxu0 %v61
    %82 = vmatprep.subr.mxu0 0.0
    %83 = vmatpush1.msra.mxu0 %v62
    %84 = vmatprep.subr.mxu0 0.0
    %85 = vmatpush1.msra.mxu0 %v63
    %86 = vmatprep.subr.mxu0 0.0
    %87 = vmatpush1.msra.mxu0 %v64
    %88 = vmatprep.subr.mxu0 0.0
    %89 = vmatpush1.msra.mxu0 %v65
    %90 = vmatprep.subr.mxu0 0.0
    %91 = vmatpush1.msra.mxu0 %v66
    %92 = vmatprep.subr.mxu0 0.0
    %93 = vmatpush1.msra.mxu0 0.0
    %94 = vmatprep.subr.mxu0 0.0
    %95 = vmatpush1.msra.mxu0 0.0
    %96 = vmatprep.subr.mxu0 0.0
    %97 = vmatpush1.msra.mxu0 0.0
    %98 = vmatprep.subr.mxu0 0.0
    %99 = vmatpush1.msra.mxu0 0.0
    %100 = vmatprep.subr.mxu0 0.0
    %101 = vmatpush1.msra.mxu0 0.0
    %102 = vmatprep.subr.mxu0 0.0
    %103 = vmatpush1.msra.mxu0 0.0
    %104 = vmatprep.subr.mxu0 0.0
    %105 = vmatpush1.msra.mxu0 0.0
    %106 = vmatprep.subr.mxu0 0.0
    %107 = vmatpush1.msra.mxu0 0.0
    %108 = vmatprep.subr.mxu0 0.0
    %109 = vmatpush1.msra.mxu0 0.0
    %110 = vmatprep.subr.mxu0 0.0
    %111 = vmatpush1.msra.mxu0 0.0
    %112 = vmatprep.subr.mxu0 0.0
    %113 = vmatpush1.msra.mxu0 0.0
    %114 = vmatprep.subr.mxu0 0.0
    %115 = vmatpush1.msra.mxu0 0.0
    %116 = vmatprep.subr.mxu0 0.0
    %117 = vmatpush1.msra.mxu0 0.0
    %118 = vmatprep.subr.mxu0 0.0
    %119 = vmatpush1.msra.mxu0 0.0
    %120 = vmatprep.subr.mxu0 0.0
    %121 = vmatpush1.msra.mxu0 0.0
    %122 = vmatprep.subr.mxu0 0.0
    %123 = vmatpush1.msra.mxu0 0.0
    %124 = vmatprep.subr.mxu0 0.0
    %125 = vmatpush1.msra.mxu0 0.0
    %126 = vmatprep.subr.mxu0 0.0
    %127 = vmatpush1.msra.mxu0 0.0
    %128 = vmatprep.subr.mxu0 0.0
    %129 = vmatpush1.msra.mxu0 0.0
    %130 = vmatprep.subr.mxu0 0.0
    %131 = vmatpush1.msra.mxu0 0.0
    %132 = vmatprep.subr.mxu0 0.0
    %133 = vmatpush1.msra.mxu0 0.0
    %134 = vmatprep.subr.mxu0 0.0
    %135 = vmatpush1.msra.mxu0 0.0
    %136 = vmatprep.subr.mxu0 0.0
    %137 = vmatpush1.msra.mxu0 0.0
    %138 = vmatprep.subr.mxu0 0.0
    %139 = vmatpush1.msra.mxu0 0.0
    %140 = vmatprep.mubr.f32.mxu0 0.0
    %141 = vmatmul.mubr.f32.gmra.mrb[0].mxu0 %v71
    %v142 = vpop.f32.mrb[0].mxu0
    %v143 = vadd.f32 %v67, %v142
    %v144 = vpop.f32.mrb[0].mxu0
    %145 = vmatprep.mubr.f32.mxu0 0.0
    %146 = vmatmul.mubr.f32.gmra.mrb[0].mxu0 %v74
    %v147 = vpop.f32.mrb[0].mxu0
    %v148 = vadd.f32 %v68, %v147
    %v149 = vpop.f32.mrb[0].mxu0
    %150 = vdwg.mxu0
    %v151 = vld [vmem:[#allocation2 + $0x50] sm:$0xff]
    %v152 = vld [vmem:[#allocation2 + $0x58] sm:$0xff]
    %v153 = vld [vmem:[#allocation2 + $0x60] sm:$0xff]
    %v154 = vld [vmem:[#allocation4] sm:$0xf]
    %v155 = vld [vmem:[#allocation4 + $0x4] sm:$0xf]
    %v156 = vld [vmem:[#allocation4 + $0x8] sm:$0xf]
    %v157 = vld [vmem:[#allocation4 + $0xc] sm:$0xf]
    %v158 = vld [vmem:[#allocation4 + $0x10] sm:$0xf]
    %v159 = vld [vmem:[#allocation4 + $0x14] sm:$0xf]
    %v160 = vld [vmem:[#allocation4 + $0x18] sm:$0xf]
    %v161 = vld [vmem:[#allocation4 + $0x1c] sm:$0xf]
    %v162 = vld [vmem:[#allocation4 + $0x20] sm:$0xf]
    %v163 = vld [vmem:[#allocation4 + $0x24] sm:$0xf]
    %v164 = vld [vmem:[#allocation4 + $0x28] sm:$0xf]
    %v165 = vld [vmem:[#allocation4 + $0x2c] sm:$0xf]
    %v166 = vld [vmem:[#allocation4 + $0x30] sm:$0xf]
    %v167 = vld [vmem:[#allocation4 + $0x34] sm:$0xf]
    %v168 = vld [vmem:[#allocation4 + $0x38] sm:$0xf]
    %v169 = vld [vmem:[#allocation4 + $0x3c] sm:$0xf]
    %v170 = vld [vmem:[#allocation4 + $0x40] sm:$0xf]
    %v171 = vld [vmem:[#allocation4 + $0x44] sm:$0xf]
    %v172 = vld [vmem:[#allocation4 + $0x48] sm:$0xf]
    %v173 = vld [vmem:[#allocation4 + $0x4c] sm:$0xf]
    %vm174 = vcmask 261120
    %v175 = vsel %vm174, %v143, 0.0
    %176 = vadd.xlane.f32.xlu0 %v175
    %v177 = vpop.xlane.xlu0 %176
    %v178 = vsel %vm174, %v148, 0.0
    %179 = vadd.xlane.f32.xlu0 %v178
    %v180 = vpop.xlane.xlu0 %179
    %v181 = vrcp.pop 32.0
    %v182 = vmul.f32 %v177, %v181
    %v183 = vmul.f32 %v180, %v181
    %v184 = vsub.f32 %v143, %v182
    %v185 = vsub.f32 %v148, %v183
    %v186 = vmul.f32 %v184, %v184
    %v187 = vmul.f32 %v185, %v185
    %v188 = vsel %vm174, %v186, 0.0
    %189 = vadd.xlane.f32.xlu0 %v188
    %v190 = vpop.xlane.xlu0 %189
    %v191 = vsel %vm174, %v187, 0.0
    %192 = vadd.xlane.f32.xlu0 %v191
    %v193 = vpop.xlane.xlu0 %192
    %v194 = vmul.f32 %v190, %v181
    %v195 = vmul.f32 %v193, %v181
    %v196 = vadd.f32 %v194, 1e-05
    %v197 = vadd.f32 %v195, 1e-05
    %v198 = vrsqrt.pop %v196
    %v199 = vrsqrt.pop %v197
    %v200 = vmul.f32 %v184, %v198
    %v201 = vmul.f32 %v185, %v199
    %v202 = vlaneseq
    %v203 = vshrl.u32 %v202, 7
    %v204 = vsub.s32 0, %v203
    %v205 = vrot.slane %v153, %v204
    %v206 = vmul.f32 %v200, %v205
    %v207 = vmul.f32 %v201, %v205
    %v208 = vlaneseq
    %v209 = vshrl.u32 %v208, 7
    %v210 = vsub.s32 1, %v209
    %v211 = vrot.slane %v153, %v210
    %v212 = vadd.f32 %v206, %v211
    %v213 = vadd.f32 %v207, %v211
    %v214 = vpack.c.bf16 %v213, %v212
    %v215 = vlaneseq
    %v216 = vshrl.u32 %v215, 7
    %v217 = vsub.s32 2, %v216
    %v218 = vrot.slane %v153, %v217
    %v223 = vunpack.c.l.b16 %v154
    %v224 = vunpack.c.l.b16 %v155
    %v225 = vunpack.c.l.b16 %v156
    %v226 = vunpack.c.l.b16 %v157
    %v227 = vpack.c.b16 %v224, %v223
    %v228 = vpack.c.b16 %v226, %v225
    %v232 = vsel %vm174, %v214, 0
    %234 = vmatprep.subr.bf16.mxu0 0
    %235 = vmatpush1.bf16.msra.mxu0 %v227
    %236 = vmatprep.subr.bf16.mxu0 0
    %237 = vmatpush1.bf16.msra.mxu0 %v228
    %238 = vmatprep.subr.bf16.mxu0 0
    %239 = vmatpush1.bf16.msra.mxu0 0
    %240 = vmatprep.subr.bf16.mxu0 0
    %241 = vmatpush1.bf16.msra.mxu0 0
    %242 = vmatprep.subr.bf16.mxu0 0
    %243 = vmatpush1.bf16.msra.mxu0 0
    %244 = vmatprep.subr.bf16.mxu0 0
    %245 = vmatpush1.bf16.msra.mxu0 0
    %246 = vmatprep.subr.bf16.mxu0 0
    %247 = vmatpush1.bf16.msra.mxu0 0
    %248 = vmatprep.subr.bf16.mxu0 0
    %249 = vmatpush1.bf16.msra.mxu0 0
    %250 = vmatprep.subr.bf16.mxu0 0
    %251 = vmatpush1.bf16.msra.mxu0 0
    %252 = vmatprep.subr.bf16.mxu0 0
    %253 = vmatpush1.bf16.msra.mxu0 0
    %254 = vmatprep.subr.bf16.mxu0 0
    %255 = vmatpush1.bf16.msra.mxu0 0
    %256 = vmatprep.subr.bf16.mxu0 0
    %257 = vmatpush1.bf16.msra.mxu0 0
    %258 = vmatprep.subr.bf16.mxu0 0
    %259 = vmatpush1.bf16.msra.mxu0 0
    %260 = vmatprep.subr.bf16.mxu0 0
    %261 = vmatpush1.bf16.msra.mxu0 0
    %262 = vmatprep.subr.bf16.mxu0 0
    %263 = vmatpush1.bf16.msra.mxu0 0
    %264 = vmatprep.subr.bf16.mxu0 0
    %265 = vmatpush1.bf16.msra.mxu0 0
    %266 = vmatprep.mubr.bf16.mxu0 0
    %267 = vmatmul.mubr.bf16.gmra.mrb[0].mxu0 %v232
    %v268 = vpop.f32.mrb[0].mxu0
    %v269 = vadd.f32 %v218, %v268
    %v270 = vpop.f32.mrb[0].mxu0
    %v271 = vpop.f32.mrb[0].mxu0
    %v272 = vadd.f32 %v218, %v271
    %v273 = vpop.f32.mrb[0].mxu0
    %274 = vdwg.mxu0
    %v275 = vpack.c.bf16 %v272, %v269
    %277 = vrot.lane.b32.xlu0 %v275, 96
    %v278 = vpop.permute.xlu0 %277
    %vm279 = vcmask 64512
    %v281 = vsel %vm279, %v275, 0
    %v284 = vsel %vm279, %v278, 0
    %286 = vmatprep.subr.bf16.mxu0 0
    %287 = vmatpush1.bf16.xpose.msra.mxu0 %v284
    %288 = vmatprep.subr.bf16.mxu0 0
    %289 = vmatpush1.bf16.xpose.msra.mxu0 0
    %290 = vmatprep.subr.bf16.mxu0 0
    %291 = vmatpush1.bf16.xpose.msra.mxu0 0
    %292 = vmatprep.subr.bf16.mxu0 0
    %293 = vmatpush1.bf16.xpose.msra.mxu0 0
    %294 = vmatprep.subr.bf16.mxu0 0
    %295 = vmatpush1.bf16.xpose.msra.mxu0 0
    %296 = vmatprep.subr.bf16.mxu0 0
    %297 = vmatpush1.bf16.xpose.msra.mxu0 0
    %298 = vmatprep.subr.bf16.mxu0 0
    %299 = vmatpush1.bf16.xpose.msra.mxu0 0
    %300 = vmatprep.subr.bf16.mxu0 0
    %301 = vmatpush1.bf16.xpose.msra.mxu0 0
    %302 = vmatprep.subr.bf16.mxu0 0
    %303 = vmatpush1.bf16.xpose.msra.mxu0 0
    %304 = vmatprep.subr.bf16.mxu0 0
    %305 = vmatpush1.bf16.xpose.msra.mxu0 0
    %306 = vmatprep.subr.bf16.mxu0 0
    %307 = vmatpush1.bf16.xpose.msra.mxu0 0
    %308 = vmatprep.subr.bf16.mxu0 0
    %309 = vmatpush1.bf16.xpose.msra.mxu0 0
    %310 = vmatprep.subr.bf16.mxu0 0
    %311 = vmatpush1.bf16.xpose.msra.mxu0 0
    %312 = vmatprep.subr.bf16.mxu0 0
    %313 = vmatpush1.bf16.xpose.msra.mxu0 0
    %314 = vmatprep.subr.bf16.mxu0 0
    %315 = vmatpush1.bf16.xpose.msra.mxu0 0
    %316 = vmatprep.subr.bf16.mxu0 0
    %317 = vmatpush1.bf16.xpose.msra.mxu0 0
    %318 = vmatprep.mubr.bf16.mxu0 0
    %319 = vmatmul.mubr.bf16.gmra.mrb[0].mxu0 %v281
    %v320 = vpop.f32.mrb[0].mxu0
    %v321 = vadd.f32 %v151, %v320
    %v322 = vpop.f32.mrb[0].mxu0
    %v323 = vpop.f32.mrb[0].mxu0
    %v324 = vadd.f32 %v152, %v323
    %v325 = vpop.f32.mrb[0].mxu0
    %326 = vdwg.mxu0
    %vm327 = vcmask 130048
    %v328 = vsel %vm327, %v321, -inf
    %329 = vmax.xlane.f32.xlu0 %v328
    %v330 = vpop.xlane.xlu0 %329
    %v331 = vsel %vm327, %v324, -inf
    %332 = vmax.xlane.f32.xlu0 %v331
    %v333 = vpop.xlane.xlu0 %332
    %v334 = vsub.f32 %v321, %v330
    %v335 = vsub.f32 %v324, %v333
    %v336 = vmul.f32 %v334, 1.442695
    %v337 = vpow.pop %v336
    %v338 = vmul.f32 %v335, 1.442695
    %v339 = vpow.pop %v338
    %v340 = vsel %vm327, %v337, 0.0
    %341 = vadd.xlane.f32.xlu0 %v340
    %v342 = vpop.xlane.xlu0 %341
    %v343 = vsel %vm327, %v339, 0.0
    %344 = vadd.xlane.f32.xlu0 %v343
    %v345 = vpop.xlane.xlu0 %344
    %v346 = vrcp.pop %v342
    %v347 = vmul.f32 %v337, %v346
    %v348 = vrcp.pop %v345
    %v349 = vmul.f32 %v339, %v348
    %v350 = vpack.c.bf16 %v349, %v347
    %351 = vrot.lane.b32.xlu0 %v275, 64
    %v352 = vpop.permute.xlu0 %351
    %v355 = vsel %vm327, %v350, 0
    %357 = vmatprep.subr.bf16.mxu0 0
    %358 = vmatpush1.bf16.msra.mxu0 %v352
    %359 = vmatprep.subr.bf16.mxu0 0
    %360 = vmatpush1.bf16.msra.mxu0 0
    %361 = vmatprep.subr.bf16.mxu0 0
    %362 = vmatpush1.bf16.msra.mxu0 0
    %363 = vmatprep.subr.bf16.mxu0 0
    %364 = vmatpush1.bf16.msra.mxu0 0
    %365 = vmatprep.subr.bf16.mxu0 0
    %366 = vmatpush1.bf16.msra.mxu0 0
    %367 = vmatprep.subr.bf16.mxu0 0
    %368 = vmatpush1.bf16.msra.mxu0 0
    %369 = vmatprep.subr.bf16.mxu0 0
    %370 = vmatpush1.bf16.msra.mxu0 0
    %371 = vmatprep.subr.bf16.mxu0 0
    %372 = vmatpush1.bf16.msra.mxu0 0
    %373 = vmatprep.subr.bf16.mxu0 0
    %374 = vmatpush1.bf16.msra.mxu0 0
    %375 = vmatprep.subr.bf16.mxu0 0
    %376 = vmatpush1.bf16.msra.mxu0 0
    %377 = vmatprep.subr.bf16.mxu0 0
    %378 = vmatpush1.bf16.msra.mxu0 0
    %379 = vmatprep.subr.bf16.mxu0 0
    %380 = vmatpush1.bf16.msra.mxu0 0
    %381 = vmatprep.subr.bf16.mxu0 0
    %382 = vmatpush1.bf16.msra.mxu0 0
    %383 = vmatprep.subr.bf16.mxu0 0
    %384 = vmatpush1.bf16.msra.mxu0 0
    %385 = vmatprep.subr.bf16.mxu0 0
    %386 = vmatpush1.bf16.msra.mxu0 0
    %387 = vmatprep.subr.bf16.mxu0 0
    %388 = vmatpush1.bf16.msra.mxu0 0
    %389 = vmatprep.mubr.bf16.mxu0 0
    %390 = vmatmul.mubr.bf16.gmra.mrb[0].mxu0 %v355
    %v391 = vpop.f32.mrb[0].mxu0
    %v392 = vadd.f32 0.0, %v391
    %v393 = vpop.f32.mrb[0].mxu0
    %v394 = vpop.f32.mrb[0].mxu0
    %v395 = vadd.f32 0.0, %v394
    %v396 = vpop.f32.mrb[0].mxu0
    %397 = vdwg.mxu0
    %398 = vrot.lane.b32.xlu0 %v275, 120
    %v399 = vpop.permute.xlu0 %398
    %400 = vrot.lane.b32.xlu0 %v275, 88
    %v401 = vpop.permute.xlu0 %400
    %v403 = vsel %vm279, %v399, 0
    %v406 = vsel %vm279, %v401, 0
    %408 = vmatprep.subr.bf16.mxu0 0
    %409 = vmatpush1.bf16.xpose.msra.mxu0 %v406
    %410 = vmatprep.subr.bf16.mxu0 0
    %411 = vmatpush1.bf16.xpose.msra.mxu0 0
    %412 = vmatprep.subr.bf16.mxu0 0
    %413 = vmatpush1.bf16.xpose.msra.mxu0 0
    %414 = vmatprep.subr.bf16.mxu0 0
    %415 = vmatpush1.bf16.xpose.msra.mxu0 0
    %416 = vmatprep.subr.bf16.mxu0 0
    %417 = vmatpush1.bf16.xpose.msra.mxu0 0
    %418 = vmatprep.subr.bf16.mxu0 0
    %419 = vmatpush1.bf16.xpose.msra.mxu0 0
    %420 = vmatprep.subr.bf16.mxu0 0
    %421 = vmatpush1.bf16.xpose.msra.mxu0 0
    %422 = vmatprep.subr.bf16.mxu0 0
    %423 = vmatpush1.bf16.xpose.msra.mxu0 0
    %424 = vmatprep.subr.bf16.mxu0 0
    %425 = vmatpush1.bf16.xpose.msra.mxu0 0
    %426 = vmatprep.subr.bf16.mxu0 0
    %427 = vmatpush1.bf16.xpose.msra.mxu0 0
    %428 = vmatprep.subr.bf16.mxu0 0
    %429 = vmatpush1.bf16.xpose.msra.mxu0 0
    %430 = vmatprep.subr.bf16.mxu0 0
    %431 = vmatpush1.bf16.xpose.msra.mxu0 0
    %432 = vmatprep.subr.bf16.mxu0 0
    %433 = vmatpush1.bf16.xpose.msra.mxu0 0
    %434 = vmatprep.subr.bf16.mxu0 0
    %435 = vmatpush1.bf16.xpose.msra.mxu0 0
    %436 = vmatprep.subr.bf16.mxu0 0
    %437 = vmatpush1.bf16.xpose.msra.mxu0 0
    %438 = vmatprep.subr.bf16.mxu0 0
    %439 = vmatpush1.bf16.xpose.msra.mxu0 0
    %440 = vmatprep.mubr.bf16.mxu0 0
    %441 = vmatmul.mubr.bf16.gmra.mrb[0].mxu0 %v403
    %v442 = vpop.f32.mrb[0].mxu0
    %v443 = vadd.f32 %v151, %v442
    %v444 = vpop.f32.mrb[0].mxu0
    %v445 = vpop.f32.mrb[0].mxu0
    %v446 = vadd.f32 %v152, %v445
    %v447 = vpop.f32.mrb[0].mxu0
    %448 = vdwg.mxu0
    %v449 = vsel %vm327, %v443, -inf
    %450 = vmax.xlane.f32.xlu0 %v449
    %v451 = vpop.xlane.xlu0 %450
    %v452 = vsel %vm327, %v446, -inf
    %453 = vmax.xlane.f32.xlu0 %v452
    %v454 = vpop.xlane.xlu0 %453
    %v455 = vsub.f32 %v443, %v451
    %v456 = vsub.f32 %v446, %v454
    %v457 = vmul.f32 %v455, 1.442695
    %v458 = vpow.pop %v457
    %v459 = vmul.f32 %v456, 1.442695
    %v460 = vpow.pop %v459
    %v461 = vsel %vm327, %v458, 0.0
    %462 = vadd.xlane.f32.xlu0 %v461
    %v463 = vpop.xlane.xlu0 %462
    %v464 = vsel %vm327, %v460, 0.0
    %465 = vadd.xlane.f32.xlu0 %v464
    %v466 = vpop.xlane.xlu0 %465
    %v467 = vrcp.pop %v463
    %v468 = vmul.f32 %v458, %v467
    %v469 = vrcp.pop %v466
    %v470 = vmul.f32 %v460, %v469
    %v471 = vpack.c.bf16 %v470, %v468
    %472 = vrot.lane.b32.xlu0 %v275, 56
    %v473 = vpop.permute.xlu0 %472
    %v476 = vsel %vm327, %v471, 0
    %478 = vmatprep.subr.bf16.mxu0 0
    %479 = vmatpush1.bf16.msra.mxu0 %v473
    %480 = vmatprep.subr.bf16.mxu0 0
    %481 = vmatpush1.bf16.msra.mxu0 0
    %482 = vmatprep.subr.bf16.mxu0 0
    %483 = vmatpush1.bf16.msra.mxu0 0
    %484 = vmatprep.subr.bf16.mxu0 0
    %485 = vmatpush1.bf16.msra.mxu0 0
    %486 = vmatprep.subr.bf16.mxu0 0
    %487 = vmatpush1.bf16.msra.mxu0 0
    %488 = vmatprep.subr.bf16.mxu0 0
    %489 = vmatpush1.bf16.msra.mxu0 0
    %490 = vmatprep.subr.bf16.mxu0 0
    %491 = vmatpush1.bf16.msra.mxu0 0
    %492 = vmatprep.subr.bf16.mxu0 0
    %493 = vmatpush1.bf16.msra.mxu0 0
    %494 = vmatprep.subr.bf16.mxu0 0
    %495 = vmatpush1.bf16.msra.mxu0 0
    %496 = vmatprep.subr.bf16.mxu0 0
    %497 = vmatpush1.bf16.msra.mxu0 0
    %498 = vmatprep.subr.bf16.mxu0 0
    %499 = vmatpush1.bf16.msra.mxu0 0
    %500 = vmatprep.subr.bf16.mxu0 0
    %501 = vmatpush1.bf16.msra.mxu0 0
    %502 = vmatprep.subr.bf16.mxu0 0
    %503 = vmatpush1.bf16.msra.mxu0 0
    %504 = vmatprep.subr.bf16.mxu0 0
    %505 = vmatpush1.bf16.msra.mxu0 0
    %506 = vmatprep.subr.bf16.mxu0 0
    %507 = vmatpush1.bf16.msra.mxu0 0
    %508 = vmatprep.subr.bf16.mxu0 0
    %509 = vmatpush1.bf16.msra.mxu0 0
    %510 = vmatprep.mubr.bf16.mxu0 0
    %511 = vmatmul.mubr.bf16.gmra.mrb[0].mxu0 %v476
    %v512 = vpop.f32.mrb[0].mxu0
    %v513 = vadd.f32 0.0, %v512
    %v514 = vpop.f32.mrb[0].mxu0
    %v515 = vpop.f32.mrb[0].mxu0
    %v516 = vadd.f32 0.0, %v515
    %v517 = vpop.f32.mrb[0].mxu0
    %518 = vdwg.mxu0
    %519 = vrot.lane.b32.xlu0 %v275, 112
    %v520 = vpop.permute.xlu0 %519
    %521 = vrot.lane.b32.xlu0 %v275, 80
    %v522 = vpop.permute.xlu0 %521
    %v524 = vsel %vm279, %v520, 0
    %v527 = vsel %vm279, %v522, 0
    %529 = vmatprep.subr.bf16.mxu0 0
    %530 = vmatpush1.bf16.xpose.msra.mxu0 %v527
    %531 = vmatprep.subr.bf16.mxu0 0
    %532 = vmatpush1.bf16.xpose.msra.mxu0 0
    %533 = vmatprep.subr.bf16.mxu0 0
    %534 = vmatpush1.bf16.xpose.msra.mxu0 0
    %535 = vmatprep.subr.bf16.mxu0 0
    %536 = vmatpush1.bf16.xpose.msra.mxu0 0
    %537 = vmatprep.subr.bf16.mxu0 0
    %538 = vmatpush1.bf16.xpose.msra.mxu0 0
    %539 = vmatprep.subr.bf16.mxu0 0
    %540 = vmatpush1.bf16.xpose.msra.mxu0 0
    %541 = vmatprep.subr.bf16.mxu0 0
    %542 = vmatpush1.bf16.xpose.msra.mxu0 0
    %543 = vmatprep.subr.bf16.mxu0 0
    %544 = vmatpush1.bf16.xpose.msra.mxu0 0
    %545 = vmatprep.subr.bf16.mxu0 0
    %546 = vmatpush1.bf16.xpose.msra.mxu0 0
    %547 = vmatprep.subr.bf16.mxu0 0
    %548 = vmatpush1.bf16.xpose.msra.mxu0 0
    %549 = vmatprep.subr.bf16.mxu0 0
    %550 = vmatpush1.bf16.xpose.msra.mxu0 0
    %551 = vmatprep.subr.bf16.mxu0 0
    %552 = vmatpush1.bf16.xpose.msra.mxu0 0
    %553 = vmatprep.subr.bf16.mxu0 0
    %554 = vmatpush1.bf16.xpose.msra.mxu0 0
    %555 = vmatprep.subr.bf16.mxu0 0
    %556 = vmatpush1.bf16.xpose.msra.mxu0 0
    %557 = vmatprep.subr.bf16.mxu0 0
    %558 = vmatpush1.bf16.xpose.msra.mxu0 0
    %559 = vmatprep.subr.bf16.mxu0 0
    %560 = vmatpush1.bf16.xpose.msra.mxu0 0
    %561 = vmatprep.mubr.bf16.mxu0 0
    %562 = vmatmul.mubr.bf16.gmra.mrb[0].mxu0 %v524
    %v563 = vpop.f32.mrb[0].mxu0
    %v564 = vadd.f32 %v151, %v563
    %v565 = vpop.f32.mrb[0].mxu0
    %v566 = vpop.f32.mrb[0].mxu0
    %v567 = vadd.f32 %v152, %v566
    %v568 = vpop.f32.mrb[0].mxu0
    %569 = vdwg.mxu0
    %v570 = vsel %vm327, %v564, -inf
    %571 = vmax.xlane.f32.xlu0 %v570
    %v572 = vpop.xlane.xlu0 %571
    %v573 = vsel %vm327, %v567, -inf
    %574 = vmax.xlane.f32.xlu0 %v573
    %v575 = vpop.xlane.xlu0 %574
    %v576 = vsub.f32 %v564, %v572
    %v577 = vsub.f32 %v567, %v575
    %v578 = vmul.f32 %v576, 1.442695
    %v579 = vpow.pop %v578
    %v580 = vmul.f32 %v577, 1.442695
    %v581 = vpow.pop %v580
    %v582 = vsel %vm327, %v579, 0.0
    %583 = vadd.xlane.f32.xlu0 %v582
    %v584 = vpop.xlane.xlu0 %583
    %v585 = vsel %vm327, %v581, 0.0
    %586 = vadd.xlane.f32.xlu0 %v585
    %v587 = vpop.xlane.xlu0 %586
    %v588 = vrcp.pop %v584
    %v589 = vmul.f32 %v579, %v588
    %v590 = vrcp.pop %v587
    %v591 = vmul.f32 %v581, %v590
    %v592 = vpack.c.bf16 %v591, %v589
    %593 = vrot.lane.b32.xlu0 %v275, 48
    %v594 = vpop.permute.xlu0 %593
    %v597 = vsel %vm327, %v592, 0
    %599 = vmatprep.subr.bf16.mxu0 0
    %600 = vmatpush1.bf16.msra.mxu0 %v594
    %601 = vmatprep.subr.bf16.mxu0 0
    %602 = vmatpush1.bf16.msra.mxu0 0
    %603 = vmatprep.subr.bf16.mxu0 0
    %604 = vmatpush1.bf16.msra.mxu0 0
    %605 = vmatprep.subr.bf16.mxu0 0
    %606 = vmatpush1.bf16.msra.mxu0 0
    %607 = vmatprep.subr.bf16.mxu0 0
    %608 = vmatpush1.bf16.msra.mxu0 0
    %609 = vmatprep.subr.bf16.mxu0 0
    %610 = vmatpush1.bf16.msra.mxu0 0
    %611 = vmatprep.subr.bf16.mxu0 0
    %612 = vmatpush1.bf16.msra.mxu0 0
    %613 = vmatprep.subr.bf16.mxu0 0
    %614 = vmatpush1.bf16.msra.mxu0 0
    %615 = vmatprep.subr.bf16.mxu0 0
    %616 = vmatpush1.bf16.msra.mxu0 0
    %617 = vmatprep.subr.bf16.mxu0 0
    %618 = vmatpush1.bf16.msra.mxu0 0
    %619 = vmatprep.subr.bf16.mxu0 0
    %620 = vmatpush1.bf16.msra.mxu0 0
    %621 = vmatprep.subr.bf16.mxu0 0
    %622 = vmatpush1.bf16.msra.mxu0 0
    %623 = vmatprep.subr.bf16.mxu0 0
    %624 = vmatpush1.bf16.msra.mxu0 0
    %625 = vmatprep.subr.bf16.mxu0 0
    %626 = vmatpush1.bf16.msra.mxu0 0
    %627 = vmatprep.subr.bf16.mxu0 0
    %628 = vmatpush1.bf16.msra.mxu0 0
    %629 = vmatprep.subr.bf16.mxu0 0
    %630 = vmatpush1.bf16.msra.mxu0 0
    %631 = vmatprep.mubr.bf16.mxu0 0
    %632 = vmatmul.mubr.bf16.gmra.mrb[0].mxu0 %v597
    %v633 = vpop.f32.mrb[0].mxu0
    %v634 = vadd.f32 0.0, %v633
    %v635 = vpop.f32.mrb[0].mxu0
    %v636 = vpop.f32.mrb[0].mxu0
    %v637 = vadd.f32 0.0, %v636
    %v638 = vpop.f32.mrb[0].mxu0
    %639 = vdwg.mxu0
    %640 = vrot.lane.b32.xlu0 %v275, 104
    %v641 = vpop.permute.xlu0 %640
    %642 = vrot.lane.b32.xlu0 %v275, 72
    %v643 = vpop.permute.xlu0 %642
    %v645 = vsel %vm279, %v641, 0
    %v648 = vsel %vm279, %v643, 0
    %650 = vmatprep.subr.bf16.mxu0 0
    %651 = vmatpush1.bf16.xpose.msra.mxu0 %v648
    %652 = vmatprep.subr.bf16.mxu0 0
    %653 = vmatpush1.bf16.xpose.msra.mxu0 0
    %654 = vmatprep.subr.bf16.mxu0 0
    %655 = vmatpush1.bf16.xpose.msra.mxu0 0
    %656 = vmatprep.subr.bf16.mxu0 0
    %657 = vmatpush1.bf16.xpose.msra.mxu0 0
    %658 = vmatprep.subr.bf16.mxu0 0
    %659 = vmatpush1.bf16.xpose.msra.mxu0 0
    %660 = vmatprep.subr.bf16.mxu0 0
    %661 = vmatpush1.bf16.xpose.msra.mxu0 0
    %662 = vmatprep.subr.bf16.mxu0 0
    %663 = vmatpush1.bf16.xpose.msra.mxu0 0
    %664 = vmatprep.subr.bf16.mxu0 0
    %665 = vmatpush1.bf16.xpose.msra.mxu0 0
    %666 = vmatprep.subr.bf16.mxu0 0
    %667 = vmatpush1.bf16.xpose.msra.mxu0 0
    %668 = vmatprep.subr.bf16.mxu0 0
    %669 = vmatpush1.bf16.xpose.msra.mxu0 0
    %670 = vmatprep.subr.bf16.mxu0 0
    %671 = vmatpush1.bf16.xpose.msra.mxu0 0
    %672 = vmatprep.subr.bf16.mxu0 0
    %673 = vmatpush1.bf16.xpose.msra.mxu0 0
    %674 = vmatprep.subr.bf16.mxu0 0
    %675 = vmatpush1.bf16.xpose.msra.mxu0 0
    %676 = vmatprep.subr.bf16.mxu0 0
    %677 = vmatpush1.bf16.xpose.msra.mxu0 0
    %678 = vmatprep.subr.bf16.mxu0 0
    %679 = vmatpush1.bf16.xpose.msra.mxu0 0
    %680 = vmatprep.subr.bf16.mxu0 0
    %681 = vmatpush1.bf16.xpose.msra.mxu0 0
    %682 = vmatprep.mubr.bf16.mxu0 0
    %683 = vmatmul.mubr.bf16.gmra.mrb[0].mxu0 %v645
    %v684 = vpop.f32.mrb[0].mxu0
    %v685 = vadd.f32 %v151, %v684
    %v686 = vpop.f32.mrb[0].mxu0
    %v687 = vpop.f32.mrb[0].mxu0
    %v688 = vadd.f32 %v152, %v687
    %v689 = vpop.f32.mrb[0].mxu0
    %690 = vdwg.mxu0
    %v691 = vsel %vm327, %v685, -inf
    %692 = vmax.xlane.f32.xlu0 %v691
    %v693 = vpop.xlane.xlu0 %692
    %v694 = vsel %vm327, %v688, -inf
    %695 = vmax.xlane.f32.xlu0 %v694
    %v696 = vpop.xlane.xlu0 %695
    %v697 = vsub.f32 %v685, %v693
    %v698 = vsub.f32 %v688, %v696
    %v699 = vmul.f32 %v697, 1.442695
    %v700 = vpow.pop %v699
    %v701 = vmul.f32 %v698, 1.442695
    %v702 = vpow.pop %v701
    %v703 = vsel %vm327, %v700, 0.0
    %704 = vadd.xlane.f32.xlu0 %v703
    %v705 = vpop.xlane.xlu0 %704
    %v706 = vsel %vm327, %v702, 0.0
    %707 = vadd.xlane.f32.xlu0 %v706
    %v708 = vpop.xlane.xlu0 %707
    %v709 = vrcp.pop %v705
    %v710 = vmul.f32 %v700, %v709
    %v711 = vrcp.pop %v708
    %v712 = vmul.f32 %v702, %v711
    %v713 = vpack.c.bf16 %v712, %v710
    %714 = vrot.lane.b32.xlu0 %v275, 40
    %v715 = vpop.permute.xlu0 %714
    %v718 = vsel %vm327, %v713, 0
    %720 = vmatprep.subr.bf16.mxu0 0
    %721 = vmatpush1.bf16.msra.mxu0 %v715
    %722 = vmatprep.subr.bf16.mxu0 0
    %723 = vmatpush1.bf16.msra.mxu0 0
    %724 = vmatprep.subr.bf16.mxu0 0
    %725 = vmatpush1.bf16.msra.mxu0 0
    %726 = vmatprep.subr.bf16.mxu0 0
    %727 = vmatpush1.bf16.msra.mxu0 0
    %728 = vmatprep.subr.bf16.mxu0 0
    %729 = vmatpush1.bf16.msra.mxu0 0
    %730 = vmatprep.subr.bf16.mxu0 0
    %731 = vmatpush1.bf16.msra.mxu0 0
    %732 = vmatprep.subr.bf16.mxu0 0
    %733 = vmatpush1.bf16.msra.mxu0 0
    %734 = vmatprep.subr.bf16.mxu0 0
    %735 = vmatpush1.bf16.msra.mxu0 0
    %736 = vmatprep.subr.bf16.mxu0 0
    %737 = vmatpush1.bf16.msra.mxu0 0
    %738 = vmatprep.subr.bf16.mxu0 0
    %739 = vmatpush1.bf16.msra.mxu0 0
    %740 = vmatprep.subr.bf16.mxu0 0
    %741 = vmatpush1.bf16.msra.mxu0 0
    %742 = vmatprep.subr.bf16.mxu0 0
    %743 = vmatpush1.bf16.msra.mxu0 0
    %744 = vmatprep.subr.bf16.mxu0 0
    %745 = vmatpush1.bf16.msra.mxu0 0
    %746 = vmatprep.subr.bf16.mxu0 0
    %747 = vmatpush1.bf16.msra.mxu0 0
    %748 = vmatprep.subr.bf16.mxu0 0
    %749 = vmatpush1.bf16.msra.mxu0 0
    %750 = vmatprep.subr.bf16.mxu0 0
    %751 = vmatpush1.bf16.msra.mxu0 0
    %752 = vmatprep.mubr.bf16.mxu0 0
    %753 = vmatmul.mubr.bf16.gmra.mrb[0].mxu0 %v718
    %v754 = vpop.f32.mrb[0].mxu0
    %v755 = vadd.f32 0.0, %v754
    %v756 = vpop.f32.mrb[0].mxu0
    %v757 = vpop.f32.mrb[0].mxu0
    %v758 = vadd.f32 0.0, %v757
    %v759 = vpop.f32.mrb[0].mxu0
    %760 = vdwg.mxu0
    %763 = vrot.lane.b32.xlu0 %v513, 8
    %v764 = vpop.permute.xlu0 %763
    %765 = vrot.lane.b32.xlu0 %v516, 8
    %v766 = vpop.permute.xlu0 %765
    %771 = vrot.lane.b32.xlu0 %v634, 16
    %v772 = vpop.permute.xlu0 %771
    %773 = vrot.lane.b32.xlu0 %v637, 16
    %v774 = vpop.permute.xlu0 %773
    %779 = vrot.lane.b32.xlu0 %v755, 24
    %v780 = vpop.permute.xlu0 %779
    %781 = vrot.lane.b32.xlu0 %v758, 24
    %v782 = vpop.permute.xlu0 %781
    %v785 = vsel %vm279, %v392, %v764
    %v786 = vsel %vm279, %v395, %v766
    %v787 = vsel %vm327, %v785, %v772
    %v788 = vsel %vm327, %v786, %v774
    %vm789 = vcmask 195584
    %v790 = vsel %vm789, %v787, %v780
    %v791 = vsel %vm789, %v788, %v782
    %v792 = vpack.c.bf16 %v791, %v790
    %v793 = vlaneseq
    %v794 = vshrl.u32 %v793, 7
    %v795 = vsub.s32 3, %v794
    %v796 = vrot.slane %v153, %v795
    %v801 = vunpack.c.l.b16 %v158
    %v802 = vunpack.c.l.b16 %v159
    %v803 = vunpack.c.l.b16 %v160
    %v804 = vunpack.c.l.b16 %v161
    %v805 = vpack.c.b16 %v802, %v801
    %v806 = vpack.c.b16 %v804, %v803
    %v810 = vsel %vm174, %v792, 0
    %812 = vmatprep.subr.bf16.mxu0 0
    %813 = vmatpush1.bf16.msra.mxu0 %v805
    %814 = vmatprep.subr.bf16.mxu0 0
    %815 = vmatpush1.bf16.msra.mxu0 %v806
    %816 = vmatprep.subr.bf16.mxu0 0
    %817 = vmatpush1.bf16.msra.mxu0 0
    %818 = vmatprep.subr.bf16.mxu0 0
    %819 = vmatpush1.bf16.msra.mxu0 0
    %820 = vmatprep.subr.bf16.mxu0 0
    %821 = vmatpush1.bf16.msra.mxu0 0
    %822 = vmatprep.subr.bf16.mxu0 0
    %823 = vmatpush1.bf16.msra.mxu0 0
    %824 = vmatprep.subr.bf16.mxu0 0
    %825 = vmatpush1.bf16.msra.mxu0 0
    %826 = vmatprep.subr.bf16.mxu0 0
    %827 = vmatpush1.bf16.msra.mxu0 0
    %828 = vmatprep.subr.bf16.mxu0 0
    %829 = vmatpush1.bf16.msra.mxu0 0
    %830 = vmatprep.subr.bf16.mxu0 0
    %831 = vmatpush1.bf16.msra.mxu0 0
    %832 = vmatprep.subr.bf16.mxu0 0
    %833 = vmatpush1.bf16.msra.mxu0 0
    %834 = vmatprep.subr.bf16.mxu0 0
    %835 = vmatpush1.bf16.msra.mxu0 0
    %836 = vmatprep.subr.bf16.mxu0 0
    %837 = vmatpush1.bf16.msra.mxu0 0
    %838 = vmatprep.subr.bf16.mxu0 0
    %839 = vmatpush1.bf16.msra.mxu0 0
    %840 = vmatprep.subr.bf16.mxu0 0
    %841 = vmatpush1.bf16.msra.mxu0 0
    %842 = vmatprep.subr.bf16.mxu0 0
    %843 = vmatpush1.bf16.msra.mxu0 0
    %844 = vmatprep.mubr.bf16.mxu0 0
    %845 = vmatmul.mubr.bf16.gmra.mrb[0].mxu0 %v810
    %v846 = vpop.f32.mrb[0].mxu0
    %v847 = vadd.f32 %v796, %v846
    %v848 = vpop.f32.mrb[0].mxu0
    %v849 = vpop.f32.mrb[0].mxu0
    %v850 = vadd.f32 %v796, %v849
    %v851 = vpop.f32.mrb[0].mxu0
    %852 = vdwg.mxu0
    %v853 = vadd.f32 %v143, %v847
    %v854 = vadd.f32 %v148, %v850
    %v855 = vsel %vm174, %v853, 0.0
    %856 = vadd.xlane.f32.xlu0 %v855
    %v857 = vpop.xlane.xlu0 %856
    %v858 = vsel %vm174, %v854, 0.0
    %859 = vadd.xlane.f32.xlu0 %v858
    %v860 = vpop.xlane.xlu0 %859
    %v861 = vmul.f32 %v857, %v181
    %v862 = vmul.f32 %v860, %v181
    %v863 = vsub.f32 %v853, %v861
    %v864 = vsub.f32 %v854, %v862
    %v865 = vmul.f32 %v863, %v863
    %v866 = vmul.f32 %v864, %v864
    %v867 = vsel %vm174, %v865, 0.0
    %868 = vadd.xlane.f32.xlu0 %v867
    %v869 = vpop.xlane.xlu0 %868
    %v870 = vsel %vm174, %v866, 0.0
    %871 = vadd.xlane.f32.xlu0 %v870
    %v872 = vpop.xlane.xlu0 %871
    %v873 = vmul.f32 %v869, %v181
    %v874 = vmul.f32 %v872, %v181
    %v875 = vadd.f32 %v873, 1e-05
    %v876 = vadd.f32 %v874, 1e-05
    %v877 = vrsqrt.pop %v875
    %v878 = vrsqrt.pop %v876
    %v879 = vmul.f32 %v863, %v877
    %v880 = vmul.f32 %v864, %v878
    %v881 = vlaneseq
    %v882 = vshrl.u32 %v881, 7
    %v883 = vsub.s32 4, %v882
    %v884 = vrot.slane %v153, %v883
    %v885 = vmul.f32 %v879, %v884
    %v886 = vmul.f32 %v880, %v884
    %v887 = vlaneseq
    %v888 = vshrl.u32 %v887, 7
    %v889 = vsub.s32 5, %v888
    %v890 = vrot.slane %v153, %v889
    %v891 = vadd.f32 %v885, %v890
    %v892 = vadd.f32 %v886, %v890
    %v893 = vpack.c.bf16 %v892, %v891
    %v894 = vlaneseq
    %v895 = vshrl.u32 %v894, 7
    %v896 = vsub.s32 6, %v895
    %v897 = vrot.slane %v153, %v896
    %v902 = vunpack.c.l.b16 %v162
    %v903 = vunpack.c.l.b16 %v163
    %v904 = vunpack.c.l.b16 %v164
    %v905 = vunpack.c.l.b16 %v165
    %v906 = vpack.c.b16 %v903, %v902
    %v907 = vpack.c.b16 %v905, %v904
    %v911 = vsel %vm174, %v893, 0
    %913 = vmatprep.subr.bf16.mxu0 0
    %914 = vmatpush1.bf16.msra.mxu0 %v906
    %915 = vmatprep.subr.bf16.mxu0 0
    %916 = vmatpush1.bf16.msra.mxu0 %v907
    %917 = vmatprep.subr.bf16.mxu0 0
    %918 = vmatpush1.bf16.msra.mxu0 0
    %919 = vmatprep.subr.bf16.mxu0 0
    %920 = vmatpush1.bf16.msra.mxu0 0
    %921 = vmatprep.subr.bf16.mxu0 0
    %922 = vmatpush1.bf16.msra.mxu0 0
    %923 = vmatprep.subr.bf16.mxu0 0
    %924 = vmatpush1.bf16.msra.mxu0 0
    %925 = vmatprep.subr.bf16.mxu0 0
    %926 = vmatpush1.bf16.msra.mxu0 0
    %927 = vmatprep.subr.bf16.mxu0 0
    %928 = vmatpush1.bf16.msra.mxu0 0
    %929 = vmatprep.subr.bf16.mxu0 0
    %930 = vmatpush1.bf16.msra.mxu0 0
    %931 = vmatprep.subr.bf16.mxu0 0
    %932 = vmatpush1.bf16.msra.mxu0 0
    %933 = vmatprep.subr.bf16.mxu0 0
    %934 = vmatpush1.bf16.msra.mxu0 0
    %935 = vmatprep.subr.bf16.mxu0 0
    %936 = vmatpush1.bf16.msra.mxu0 0
    %937 = vmatprep.subr.bf16.mxu0 0
    %938 = vmatpush1.bf16.msra.mxu0 0
    %939 = vmatprep.subr.bf16.mxu0 0
    %940 = vmatpush1.bf16.msra.mxu0 0
    %941 = vmatprep.subr.bf16.mxu0 0
    %942 = vmatpush1.bf16.msra.mxu0 0
    %943 = vmatprep.subr.bf16.mxu0 0
    %944 = vmatpush1.bf16.msra.mxu0 0
    %945 = vmatprep.mubr.bf16.mxu0 0
    %946 = vmatmul.mubr.bf16.gmra.mrb[0].mxu0 %v911
    %v947 = vpop.f32.mrb[0].mxu0
    %v948 = vadd.f32 %v897, %v947
    %v949 = vpop.f32.mrb[0].mxu0
    %v950 = vpop.f32.mrb[0].mxu0
    %v951 = vadd.f32 %v897, %v950
    %v952 = vpop.f32.mrb[0].mxu0
    %953 = vdwg.mxu0
    %v954 = vmul.f32 %v948, 0.5
    %v955 = vmul.f32 %v951, 0.5
    %v956 = vmul.f32 %v948, 0.044715
    %v957 = vmul.f32 %v951, 0.044715
    %v958 = vmul.f32 %v956, %v948
    %v959 = vmul.f32 %v957, %v951
    %v960 = vmul.f32 %v958, %v948
    %v961 = vmul.f32 %v959, %v951
    %v962 = vadd.f32 %v948, %v960
    %v963 = vadd.f32 %v951, %v961
    %v964 = vmul.f32 %v962, 0.7978846
    %v965 = vmul.f32 %v963, 0.7978846
    %v966 = vtanh.pop %v964
    %v967 = vtanh.pop %v965
    %v968 = vadd.f32 %v966, 1.0
    %v969 = vadd.f32 %v967, 1.0
    %v970 = vmul.f32 %v954, %v968
    %v971 = vmul.f32 %v955, %v969
    %v972 = vpack.c.bf16 %v971, %v970
    %v973 = vlaneseq
    %v974 = vshrl.u32 %v973, 7
    %v975 = vsub.s32 7, %v974
    %v976 = vrot.slane %v153, %v975
    %v985 = vunpack.c.l.b16 %v166
    %v986 = vunpack.c.l.b16 %v167
    %v987 = vunpack.c.l.b16 %v168
    %v988 = vunpack.c.l.b16 %v169
    %v989 = vunpack.c.l.b16 %v170
    %v990 = vunpack.c.l.b16 %v171
    %v991 = vunpack.c.l.b16 %v172
    %v992 = vunpack.c.l.b16 %v173
    %v993 = vpack.c.b16 %v986, %v985
    %v994 = vpack.c.b16 %v988, %v987
    %v995 = vpack.c.b16 %v990, %v989
    %v996 = vpack.c.b16 %v992, %v991
    %v1002 = vsel %vm69, %v972, 0
    %1004 = vmatprep.subr.bf16.mxu0 0
    %1005 = vmatpush1.bf16.msra.mxu0 %v993
    %1006 = vmatprep.subr.bf16.mxu0 0
    %1007 = vmatpush1.bf16.msra.mxu0 %v994
    %1008 = vmatprep.subr.bf16.mxu0 0
    %1009 = vmatpush1.bf16.msra.mxu0 %v995
    %1010 = vmatprep.subr.bf16.mxu0 0
    %1011 = vmatpush1.bf16.msra.mxu0 %v996
    %1012 = vmatprep.subr.bf16.mxu0 0
    %1013 = vmatpush1.bf16.msra.mxu0 0
    %1014 = vmatprep.subr.bf16.mxu0 0
    %1015 = vmatpush1.bf16.msra.mxu0 0
    %1016 = vmatprep.subr.bf16.mxu0 0
    %1017 = vmatpush1.bf16.msra.mxu0 0
    %1018 = vmatprep.subr.bf16.mxu0 0
    %1019 = vmatpush1.bf16.msra.mxu0 0
    %1020 = vmatprep.subr.bf16.mxu0 0
    %1021 = vmatpush1.bf16.msra.mxu0 0
    %1022 = vmatprep.subr.bf16.mxu0 0
    %1023 = vmatpush1.bf16.msra.mxu0 0
    %1024 = vmatprep.subr.bf16.mxu0 0
    %1025 = vmatpush1.bf16.msra.mxu0 0
    %1026 = vmatprep.subr.bf16.mxu0 0
    %1027 = vmatpush1.bf16.msra.mxu0 0
    %1028 = vmatprep.subr.bf16.mxu0 0
    %1029 = vmatpush1.bf16.msra.mxu0 0
    %1030 = vmatprep.subr.bf16.mxu0 0
    %1031 = vmatpush1.bf16.msra.mxu0 0
    %1032 = vmatprep.subr.bf16.mxu0 0
    %1033 = vmatpush1.bf16.msra.mxu0 0
    %1034 = vmatprep.subr.bf16.mxu0 0
    %1035 = vmatpush1.bf16.msra.mxu0 0
    %1036 = vmatprep.mubr.bf16.mxu0 0
    %1037 = vmatmul.mubr.bf16.gmra.mrb[0].mxu0 %v1002
    %v1038 = vpop.f32.mrb[0].mxu0
    %v1039 = vadd.f32 %v976, %v1038
    %v1040 = vpop.f32.mrb[0].mxu0
    %v1041 = vpop.f32.mrb[0].mxu0
    %v1042 = vadd.f32 %v976, %v1041
    %v1043 = vpop.f32.mrb[0].mxu0
    %1044 = vdwg.mxu0
    %v1045 = vadd.f32 %v853, %v1039
    %v1046 = vadd.f32 %v854, %v1042
    %v1047 = vld [vmem:[#allocation2 + $0x68] sm:$0xff]
    %v1048 = vld [vmem:[#allocation4 + $0x50] sm:$0xf]
    %v1049 = vld [vmem:[#allocation4 + $0x54] sm:$0xf]
    %v1050 = vld [vmem:[#allocation4 + $0x58] sm:$0xf]
    %v1051 = vld [vmem:[#allocation4 + $0x5c] sm:$0xf]
    %v1052 = vld [vmem:[#allocation4 + $0x60] sm:$0xf]
    %v1053 = vld [vmem:[#allocation4 + $0x64] sm:$0xf]
    %v1054 = vld [vmem:[#allocation4 + $0x68] sm:$0xf]
    %v1055 = vld [vmem:[#allocation4 + $0x6c] sm:$0xf]
    %v1056 = vld [vmem:[#allocation4 + $0x70] sm:$0xf]
    %v1057 = vld [vmem:[#allocation4 + $0x74] sm:$0xf]
    %v1058 = vld [vmem:[#allocation4 + $0x78] sm:$0xf]
    %v1059 = vld [vmem:[#allocation4 + $0x7c] sm:$0xf]
    %v1060 = vld [vmem:[#allocation4 + $0x80] sm:$0xf]
    %v1061 = vld [vmem:[#allocation4 + $0x84] sm:$0xf]
    %v1062 = vld [vmem:[#allocation4 + $0x88] sm:$0xf]
    %v1063 = vld [vmem:[#allocation4 + $0x8c] sm:$0xf]
    %v1064 = vld [vmem:[#allocation4 + $0x90] sm:$0xf]
    %v1065 = vld [vmem:[#allocation4 + $0x94] sm:$0xf]
    %v1066 = vld [vmem:[#allocation4 + $0x98] sm:$0xf]
    %v1067 = vld [vmem:[#allocation4 + $0x9c] sm:$0xf]
    %v1068 = vsel %vm174, %v1045, 0.0
    %1069 = vadd.xlane.f32.xlu0 %v1068
    %v1070 = vpop.xlane.xlu0 %1069
    %v1071 = vsel %vm174, %v1046, 0.0
    %1072 = vadd.xlane.f32.xlu0 %v1071
    %v1073 = vpop.xlane.xlu0 %1072
    %v1074 = vmul.f32 %v1070, %v181
    %v1075 = vmul.f32 %v1073, %v181
    %v1076 = vsub.f32 %v1045, %v1074
    %v1077 = vsub.f32 %v1046, %v1075
    %v1078 = vmul.f32 %v1076, %v1076
    %v1079 = vmul.f32 %v1077, %v1077
    %v1080 = vsel %vm174, %v1078, 0.0
    %1081 = vadd.xlane.f32.xlu0 %v1080
    %v1082 = vpop.xlane.xlu0 %1081
    %v1083 = vsel %vm174, %v1079, 0.0
    %1084 = vadd.xlane.f32.xlu0 %v1083
    %v1085 = vpop.xlane.xlu0 %1084
    %v1086 = vmul.f32 %v1082, %v181
    %v1087 = vmul.f32 %v1085, %v181
    %v1088 = vadd.f32 %v1086, 1e-05
    %v1089 = vadd.f32 %v1087, 1e-05
    %v1090 = vrsqrt.pop %v1088
    %v1091 = vrsqrt.pop %v1089
    %v1092 = vmul.f32 %v1076, %v1090
    %v1093 = vmul.f32 %v1077, %v1091
    %v1094 = vlaneseq
    %v1095 = vshrl.u32 %v1094, 7
    %v1096 = vsub.s32 0, %v1095
    %v1097 = vrot.slane %v1047, %v1096
    %v1098 = vmul.f32 %v1092, %v1097
    %v1099 = vmul.f32 %v1093, %v1097
    %v1100 = vlaneseq
    %v1101 = vshrl.u32 %v1100, 7
    %v1102 = vsub.s32 1, %v1101
    %v1103 = vrot.slane %v1047, %v1102
    %v1104 = vadd.f32 %v1098, %v1103
    %v1105 = vadd.f32 %v1099, %v1103
    %v1106 = vpack.c.bf16 %v1105, %v1104
    %v1107 = vlaneseq
    %v1108 = vshrl.u32 %v1107, 7
    %v1109 = vsub.s32 2, %v1108
    %v1110 = vrot.slane %v1047, %v1109
    %v1115 = vunpack.c.l.b16 %v1048
    %v1116 = vunpack.c.l.b16 %v1049
    %v1117 = vunpack.c.l.b16 %v1050
    %v1118 = vunpack.c.l.b16 %v1051
    %v1119 = vpack.c.b16 %v1116, %v1115
    %v1120 = vpack.c.b16 %v1118, %v1117
    %v1124 = vsel %vm174, %v1106, 0
    %1126 = vmatprep.subr.bf16.mxu0 0
    %1127 = vmatpush1.bf16.msra.mxu0 %v1119
    %1128 = vmatprep.subr.bf16.mxu0 0
    %1129 = vmatpush1.bf16.msra.mxu0 %v1120
    %1130 = vmatprep.subr.bf16.mxu0 0
    %1131 = vmatpush1.bf16.msra.mxu0 0
    %1132 = vmatprep.subr.bf16.mxu0 0
    %1133 = vmatpush1.bf16.msra.mxu0 0
    %1134 = vmatprep.subr.bf16.mxu0 0
    %1135 = vmatpush1.bf16.msra.mxu0 0
    %1136 = vmatprep.subr.bf16.mxu0 0
    %1137 = vmatpush1.bf16.msra.mxu0 0
    %1138 = vmatprep.subr.bf16.mxu0 0
    %1139 = vmatpush1.bf16.msra.mxu0 0
    %1140 = vmatprep.subr.bf16.mxu0 0
    %1141 = vmatpush1.bf16.msra.mxu0 0
    %1142 = vmatprep.subr.bf16.mxu0 0
    %1143 = vmatpush1.bf16.msra.mxu0 0
    %1144 = vmatprep.subr.bf16.mxu0 0
    %1145 = vmatpush1.bf16.msra.mxu0 0
    %1146 = vmatprep.subr.bf16.mxu0 0
    %1147 = vmatpush1.bf16.msra.mxu0 0
    %1148 = vmatprep.subr.bf16.mxu0 0
    %1149 = vmatpush1.bf16.msra.mxu0 0
    %1150 = vmatprep.subr.bf16.mxu0 0
    %1151 = vmatpush1.bf16.msra.mxu0 0
    %1152 = vmatprep.subr.bf16.mxu0 0
    %1153 = vmatpush1.bf16.msra.mxu0 0
    %1154 = vmatprep.subr.bf16.mxu0 0
    %1155 = vmatpush1.bf16.msra.mxu0 0
    %1156 = vmatprep.subr.bf16.mxu0 0
    %1157 = vmatpush1.bf16.msra.mxu0 0
    %1158 = vmatprep.mubr.bf16.mxu0 0
    %1159 = vmatmul.mubr.bf16.gmra.mrb[0].mxu0 %v1124
    %v1160 = vpop.f32.mrb[0].mxu0
    %v1161 = vadd.f32 %v1110, %v1160
    %v1162 = vpop.f32.mrb[0].mxu0
    %v1163 = vpop.f32.mrb[0].mxu0
    %v1164 = vadd.f32 %v1110, %v1163
    %v1165 = vpop.f32.mrb[0].mxu0
    %1166 = vdwg.mxu0
    %v1167 = vpack.c.bf16 %v1164, %v1161
    %1169 = vrot.lane.b32.xlu0 %v1167, 96
    %v1170 = vpop.permute.xlu0 %1169
    %v1172 = vsel %vm279, %v1167, 0
    %v1175 = vsel %vm279, %v1170, 0
    %1177 = vmatprep.subr.bf16.mxu0 0
    %1178 = vmatpush1.bf16.xpose.msra.mxu0 %v1175
    %1179 = vmatprep.subr.bf16.mxu0 0
    %1180 = vmatpush1.bf16.xpose.msra.mxu0 0
    %1181 = vmatprep.subr.bf16.mxu0 0
    %1182 = vmatpush1.bf16.xpose.msra.mxu0 0
    %1183 = vmatprep.subr.bf16.mxu0 0
    %1184 = vmatpush1.bf16.xpose.msra.mxu0 0
    %1185 = vmatprep.subr.bf16.mxu0 0
    %1186 = vmatpush1.bf16.xpose.msra.mxu0 0
    %1187 = vmatprep.subr.bf16.mxu0 0
    %1188 = vmatpush1.bf16.xpose.msra.mxu0 0
    %1189 = vmatprep.subr.bf16.mxu0 0
    %1190 = vmatpush1.bf16.xpose.msra.mxu0 0
    %1191 = vmatprep.subr.bf16.mxu0 0
    %1192 = vmatpush1.bf16.xpose.msra.mxu0 0
    %1193 = vmatprep.subr.bf16.mxu0 0
    %1194 = vmatpush1.bf16.xpose.msra.mxu0 0
    %1195 = vmatprep.subr.bf16.mxu0 0
    %1196 = vmatpush1.bf16.xpose.msra.mxu0 0
    %1197 = vmatprep.subr.bf16.mxu0 0
    %1198 = vmatpush1.bf16.xpose.msra.mxu0 0
    %1199 = vmatprep.subr.bf16.mxu0 0
    %1200 = vmatpush1.bf16.xpose.msra.mxu0 0
    %1201 = vmatprep.subr.bf16.mxu0 0
    %1202 = vmatpush1.bf16.xpose.msra.mxu0 0
    %1203 = vmatprep.subr.bf16.mxu0 0
    %1204 = vmatpush1.bf16.xpose.msra.mxu0 0
    %1205 = vmatprep.subr.bf16.mxu0 0
    %1206 = vmatpush1.bf16.xpose.msra.mxu0 0
    %1207 = vmatprep.subr.bf16.mxu0 0
    %1208 = vmatpush1.bf16.xpose.msra.mxu0 0
    %1209 = vmatprep.mubr.bf16.mxu0 0
    %1210 = vmatmul.mubr.bf16.gmra.mrb[0].mxu0 %v1172
    %v1211 = vpop.f32.mrb[0].mxu0
    %v1212 = vadd.f32 %v151, %v1211
    %v1213 = vpop.f32.mrb[0].mxu0
    %v1214 = vpop.f32.mrb[0].mxu0
    %v1215 = vadd.f32 %v152, %v1214
    %v1216 = vpop.f32.mrb[0].mxu0
    %1217 = vdwg.mxu0
    %v1218 = vsel %vm327, %v1212, -inf
    %1219 = vmax.xlane.f32.xlu0 %v1218
    %v1220 = vpop.xlane.xlu0 %1219
    %v1221 = vsel %vm327, %v1215, -inf
    %1222 = vmax.xlane.f32.xlu0 %v1221
    %v1223 = vpop.xlane.xlu0 %1222
    %v1224 = vsub.f32 %v1212, %v1220
    %v1225 = vsub.f32 %v1215, %v1223
    %v1226 = vmul.f32 %v1224, 1.442695
    %v1227 = vpow.pop %v1226
    %v1228 = vmul.f32 %v1225, 1.442695
    %v1229 = vpow.pop %v1228
    %v1230 = vsel %vm327, %v1227, 0.0
    %1231 = vadd.xlane.f32.xlu0 %v1230
    %v1232 = vpop.xlane.xlu0 %1231
    %v1233 = vsel %vm327, %v1229, 0.0
    %1234 = vadd.xlane.f32.xlu0 %v1233
    %v1235 = vpop.xlane.xlu0 %1234
    %v1236 = vrcp.pop %v1232
    %v1237 = vmul.f32 %v1227, %v1236
    %v1238 = vrcp.pop %v1235
    %v1239 = vmul.f32 %v1229, %v1238
    %v1240 = vpack.c.bf16 %v1239, %v1237
    %1241 = vrot.lane.b32.xlu0 %v1167, 64
    %v1242 = vpop.permute.xlu0 %1241
    %v1245 = vsel %vm327, %v1240, 0
    %1247 = vmatprep.subr.bf16.mxu0 0
    %1248 = vmatpush1.bf16.msra.mxu0 %v1242
    %1249 = vmatprep.subr.bf16.mxu0 0
    %1250 = vmatpush1.bf16.msra.mxu0 0
    %1251 = vmatprep.subr.bf16.mxu0 0
    %1252 = vmatpush1.bf16.msra.mxu0 0
    %1253 = vmatprep.subr.bf16.mxu0 0
    %1254 = vmatpush1.bf16.msra.mxu0 0
    %1255 = vmatprep.subr.bf16.mxu0 0
    %1256 = vmatpush1.bf16.msra.mxu0 0
    %1257 = vmatprep.subr.bf16.mxu0 0
    %1258 = vmatpush1.bf16.msra.mxu0 0
    %1259 = vmatprep.subr.bf16.mxu0 0
    %1260 = vmatpush1.bf16.msra.mxu0 0
    %1261 = vmatprep.subr.bf16.mxu0 0
    %1262 = vmatpush1.bf16.msra.mxu0 0
    %1263 = vmatprep.subr.bf16.mxu0 0
    %1264 = vmatpush1.bf16.msra.mxu0 0
    %1265 = vmatprep.subr.bf16.mxu0 0
    %1266 = vmatpush1.bf16.msra.mxu0 0
    %1267 = vmatprep.subr.bf16.mxu0 0
    %1268 = vmatpush1.bf16.msra.mxu0 0
    %1269 = vmatprep.subr.bf16.mxu0 0
    %1270 = vmatpush1.bf16.msra.mxu0 0
    %1271 = vmatprep.subr.bf16.mxu0 0
    %1272 = vmatpush1.bf16.msra.mxu0 0
    %1273 = vmatprep.subr.bf16.mxu0 0
    %1274 = vmatpush1.bf16.msra.mxu0 0
    %1275 = vmatprep.subr.bf16.mxu0 0
    %1276 = vmatpush1.bf16.msra.mxu0 0
    %1277 = vmatprep.subr.bf16.mxu0 0
    %1278 = vmatpush1.bf16.msra.mxu0 0
    %1279 = vmatprep.mubr.bf16.mxu0 0
    %1280 = vmatmul.mubr.bf16.gmra.mrb[0].mxu0 %v1245
    %v1281 = vpop.f32.mrb[0].mxu0
    %v1282 = vadd.f32 0.0, %v1281
    %v1283 = vpop.f32.mrb[0].mxu0
    %v1284 = vpop.f32.mrb[0].mxu0
    %v1285 = vadd.f32 0.0, %v1284
    %v1286 = vpop.f32.mrb[0].mxu0
    %1287 = vdwg.mxu0
    %1288 = vrot.lane.b32.xlu0 %v1167, 120
    %v1289 = vpop.permute.xlu0 %1288
    %1290 = vrot.lane.b32.xlu0 %v1167, 88
    %v1291 = vpop.permute.xlu0 %1290
    %v1293 = vsel %vm279, %v1289, 0
    %v1296 = vsel %vm279, %v1291, 0
    %1298 = vmatprep.subr.bf16.mxu0 0
    %1299 = vmatpush1.bf16.xpose.msra.mxu0 %v1296
    %1300 = vmatprep.subr.bf16.mxu0 0
    %1301 = vmatpush1.bf16.xpose.msra.mxu0 0
    %1302 = vmatprep.subr.bf16.mxu0 0
    %1303 = vmatpush1.bf16.xpose.msra.mxu0 0
    %1304 = vmatprep.subr.bf16.mxu0 0
    %1305 = vmatpush1.bf16.xpose.msra.mxu0 0
    %1306 = vmatprep.subr.bf16.mxu0 0
    %1307 = vmatpush1.bf16.xpose.msra.mxu0 0
    %1308 = vmatprep.subr.bf16.mxu0 0
    %1309 = vmatpush1.bf16.xpose.msra.mxu0 0
    %1310 = vmatprep.subr.bf16.mxu0 0
    %1311 = vmatpush1.bf16.xpose.msra.mxu0 0
    %1312 = vmatprep.subr.bf16.mxu0 0
    %1313 = vmatpush1.bf16.xpose.msra.mxu0 0
    %1314 = vmatprep.subr.bf16.mxu0 0
    %1315 = vmatpush1.bf16.xpose.msra.mxu0 0
    %1316 = vmatprep.subr.bf16.mxu0 0
    %1317 = vmatpush1.bf16.xpose.msra.mxu0 0
    %1318 = vmatprep.subr.bf16.mxu0 0
    %1319 = vmatpush1.bf16.xpose.msra.mxu0 0
    %1320 = vmatprep.subr.bf16.mxu0 0
    %1321 = vmatpush1.bf16.xpose.msra.mxu0 0
    %1322 = vmatprep.subr.bf16.mxu0 0
    %1323 = vmatpush1.bf16.xpose.msra.mxu0 0
    %1324 = vmatprep.subr.bf16.mxu0 0
    %1325 = vmatpush1.bf16.xpose.msra.mxu0 0
    %1326 = vmatprep.subr.bf16.mxu0 0
    %1327 = vmatpush1.bf16.xpose.msra.mxu0 0
    %1328 = vmatprep.subr.bf16.mxu0 0
    %1329 = vmatpush1.bf16.xpose.msra.mxu0 0
    %1330 = vmatprep.mubr.bf16.mxu0 0
    %1331 = vmatmul.mubr.bf16.gmra.mrb[0].mxu0 %v1293
    %v1332 = vpop.f32.mrb[0].mxu0
    %v1333 = vadd.f32 %v151, %v1332
    %v1334 = vpop.f32.mrb[0].mxu0
    %v1335 = vpop.f32.mrb[0].mxu0
    %v1336 = vadd.f32 %v152, %v1335
    %v1337 = vpop.f32.mrb[0].mxu0
    %1338 = vdwg.mxu0
    %v1339 = vsel %vm327, %v1333, -inf
    %1340 = vmax.xlane.f32.xlu0 %v1339
    %v1341 = vpop.xlane.xlu0 %1340
    %v1342 = vsel %vm327, %v1336, -inf
    %1343 = vmax.xlane.f32.xlu0 %v1342
    %v1344 = vpop.xlane.xlu0 %1343
    %v1345 = vsub.f32 %v1333, %v1341
    %v1346 = vsub.f32 %v1336, %v1344
    %v1347 = vmul.f32 %v1345, 1.442695
    %v1348 = vpow.pop %v1347
    %v1349 = vmul.f32 %v1346, 1.442695
    %v1350 = vpow.pop %v1349
    %v1351 = vsel %vm327, %v1348, 0.0
    %1352 = vadd.xlane.f32.xlu0 %v1351
    %v1353 = vpop.xlane.xlu0 %1352
    %v1354 = vsel %vm327, %v1350, 0.0
    %1355 = vadd.xlane.f32.xlu0 %v1354
    %v1356 = vpop.xlane.xlu0 %1355
    %v1357 = vrcp.pop %v1353
    %v1358 = vmul.f32 %v1348, %v1357
    %v1359 = vrcp.pop %v1356
    %v1360 = vmul.f32 %v1350, %v1359
    %v1361 = vpack.c.bf16 %v1360, %v1358
    %1362 = vrot.lane.b32.xlu0 %v1167, 56
    %v1363 = vpop.permute.xlu0 %1362
    %v1366 = vsel %vm327, %v1361, 0
    %1368 = vmatprep.subr.bf16.mxu0 0
    %1369 = vmatpush1.bf16.msra.mxu0 %v1363
    %1370 = vmatprep.subr.bf16.mxu0 0
    %1371 = vmatpush1.bf16.msra.mxu0 0
    %1372 = vmatprep.subr.bf16.mxu0 0
    %1373 = vmatpush1.bf16.msra.mxu0 0
    %1374 = vmatprep.subr.bf16.mxu0 0
    %1375 = vmatpush1.bf16.msra.mxu0 0
    %1376 = vmatprep.subr.bf16.mxu0 0
    %1377 = vmatpush1.bf16.msra.mxu0 0
    %1378 = vmatprep.subr.bf16.mxu0 0
    %1379 = vmatpush1.bf16.msra.mxu0 0
    %1380 = vmatprep.subr.bf16.mxu0 0
    %1381 = vmatpush1.bf16.msra.mxu0 0
    %1382 = vmatprep.subr.bf16.mxu0 0
    %1383 = vmatpush1.bf16.msra.mxu0 0
    %1384 = vmatprep.subr.bf16.mxu0 0
    %1385 = vmatpush1.bf16.msra.mxu0 0
    %1386 = vmatprep.subr.bf16.mxu0 0
    %1387 = vmatpush1.bf16.msra.mxu0 0
    %1388 = vmatprep.subr.bf16.mxu0 0
    %1389 = vmatpush1.bf16.msra.mxu0 0
    %1390 = vmatprep.subr.bf16.mxu0 0
    %1391 = vmatpush1.bf16.msra.mxu0 0
    %1392 = vmatprep.subr.bf16.mxu0 0
    %1393 = vmatpush1.bf16.msra.mxu0 0
    %1394 = vmatprep.subr.bf16.mxu0 0
    %1395 = vmatpush1.bf16.msra.mxu0 0
    %1396 = vmatprep.subr.bf16.mxu0 0
    %1397 = vmatpush1.bf16.msra.mxu0 0
    %1398 = vmatprep.subr.bf16.mxu0 0
    %1399 = vmatpush1.bf16.msra.mxu0 0
    %1400 = vmatprep.mubr.bf16.mxu0 0
    %1401 = vmatmul.mubr.bf16.gmra.mrb[0].mxu0 %v1366
    %v1402 = vpop.f32.mrb[0].mxu0
    %v1403 = vadd.f32 0.0, %v1402
    %v1404 = vpop.f32.mrb[0].mxu0
    %v1405 = vpop.f32.mrb[0].mxu0
    %v1406 = vadd.f32 0.0, %v1405
    %v1407 = vpop.f32.mrb[0].mxu0
    %1408 = vdwg.mxu0
    %1409 = vrot.lane.b32.xlu0 %v1167, 112
    %v1410 = vpop.permute.xlu0 %1409
    %1411 = vrot.lane.b32.xlu0 %v1167, 80
    %v1412 = vpop.permute.xlu0 %1411
    %v1414 = vsel %vm279, %v1410, 0
    %v1417 = vsel %vm279, %v1412, 0
    %1419 = vmatprep.subr.bf16.mxu0 0
    %1420 = vmatpush1.bf16.xpose.msra.mxu0 %v1417
    %1421 = vmatprep.subr.bf16.mxu0 0
    %1422 = vmatpush1.bf16.xpose.msra.mxu0 0
    %1423 = vmatprep.subr.bf16.mxu0 0
    %1424 = vmatpush1.bf16.xpose.msra.mxu0 0
    %1425 = vmatprep.subr.bf16.mxu0 0
    %1426 = vmatpush1.bf16.xpose.msra.mxu0 0
    %1427 = vmatprep.subr.bf16.mxu0 0
    %1428 = vmatpush1.bf16.xpose.msra.mxu0 0
    %1429 = vmatprep.subr.bf16.mxu0 0
    %1430 = vmatpush1.bf16.xpose.msra.mxu0 0
    %1431 = vmatprep.subr.bf16.mxu0 0
    %1432 = vmatpush1.bf16.xpose.msra.mxu0 0
    %1433 = vmatprep.subr.bf16.mxu0 0
    %1434 = vmatpush1.bf16.xpose.msra.mxu0 0
    %1435 = vmatprep.subr.bf16.mxu0 0
    %1436 = vmatpush1.bf16.xpose.msra.mxu0 0
    %1437 = vmatprep.subr.bf16.mxu0 0
    %1438 = vmatpush1.bf16.xpose.msra.mxu0 0
    %1439 = vmatprep.subr.bf16.mxu0 0
    %1440 = vmatpush1.bf16.xpose.msra.mxu0 0
    %1441 = vmatprep.subr.bf16.mxu0 0
    %1442 = vmatpush1.bf16.xpose.msra.mxu0 0
    %1443 = vmatprep.subr.bf16.mxu0 0
    %1444 = vmatpush1.bf16.xpose.msra.mxu0 0
    %1445 = vmatprep.subr.bf16.mxu0 0
    %1446 = vmatpush1.bf16.xpose.msra.mxu0 0
    %1447 = vmatprep.subr.bf16.mxu0 0
    %1448 = vmatpush1.bf16.xpose.msra.mxu0 0
    %1449 = vmatprep.subr.bf16.mxu0 0
    %1450 = vmatpush1.bf16.xpose.msra.mxu0 0
    %1451 = vmatprep.mubr.bf16.mxu0 0
    %1452 = vmatmul.mubr.bf16.gmra.mrb[0].mxu0 %v1414
    %v1453 = vpop.f32.mrb[0].mxu0
    %v1454 = vadd.f32 %v151, %v1453
    %v1455 = vpop.f32.mrb[0].mxu0
    %v1456 = vpop.f32.mrb[0].mxu0
    %v1457 = vadd.f32 %v152, %v1456
    %v1458 = vpop.f32.mrb[0].mxu0
    %1459 = vdwg.mxu0
    %v1460 = vsel %vm327, %v1454, -inf
    %1461 = vmax.xlane.f32.xlu0 %v1460
    %v1462 = vpop.xlane.xlu0 %1461
    %v1463 = vsel %vm327, %v1457, -inf
    %1464 = vmax.xlane.f32.xlu0 %v1463
    %v1465 = vpop.xlane.xlu0 %1464
    %v1466 = vsub.f32 %v1454, %v1462
    %v1467 = vsub.f32 %v1457, %v1465
    %v1468 = vmul.f32 %v1466, 1.442695
    %v1469 = vpow.pop %v1468
    %v1470 = vmul.f32 %v1467, 1.442695
    %v1471 = vpow.pop %v1470
    %v1472 = vsel %vm327, %v1469, 0.0
    %1473 = vadd.xlane.f32.xlu0 %v1472
    %v1474 = vpop.xlane.xlu0 %1473
    %v1475 = vsel %vm327, %v1471, 0.0
    %1476 = vadd.xlane.f32.xlu0 %v1475
    %v1477 = vpop.xlane.xlu0 %1476
    %v1478 = vrcp.pop %v1474
    %v1479 = vmul.f32 %v1469, %v1478
    %v1480 = vrcp.pop %v1477
    %v1481 = vmul.f32 %v1471, %v1480
    %v1482 = vpack.c.bf16 %v1481, %v1479
    %1483 = vrot.lane.b32.xlu0 %v1167, 48
    %v1484 = vpop.permute.xlu0 %1483
    %v1487 = vsel %vm327, %v1482, 0
    %1489 = vmatprep.subr.bf16.mxu0 0
    %1490 = vmatpush1.bf16.msra.mxu0 %v1484
    %1491 = vmatprep.subr.bf16.mxu0 0
    %1492 = vmatpush1.bf16.msra.mxu0 0
    %1493 = vmatprep.subr.bf16.mxu0 0
    %1494 = vmatpush1.bf16.msra.mxu0 0
    %1495 = vmatprep.subr.bf16.mxu0 0
    %1496 = vmatpush1.bf16.msra.mxu0 0
    %1497 = vmatprep.subr.bf16.mxu0 0
    %1498 = vmatpush1.bf16.msra.mxu0 0
    %1499 = vmatprep.subr.bf16.mxu0 0
    %1500 = vmatpush1.bf16.msra.mxu0 0
    %1501 = vmatprep.subr.bf16.mxu0 0
    %1502 = vmatpush1.bf16.msra.mxu0 0
    %1503 = vmatprep.subr.bf16.mxu0 0
    %1504 = vmatpush1.bf16.msra.mxu0 0
    %1505 = vmatprep.subr.bf16.mxu0 0
    %1506 = vmatpush1.bf16.msra.mxu0 0
    %1507 = vmatprep.subr.bf16.mxu0 0
    %1508 = vmatpush1.bf16.msra.mxu0 0
    %1509 = vmatprep.subr.bf16.mxu0 0
    %1510 = vmatpush1.bf16.msra.mxu0 0
    %1511 = vmatprep.subr.bf16.mxu0 0
    %1512 = vmatpush1.bf16.msra.mxu0 0
    %1513 = vmatprep.subr.bf16.mxu0 0
    %1514 = vmatpush1.bf16.msra.mxu0 0
    %1515 = vmatprep.subr.bf16.mxu0 0
    %1516 = vmatpush1.bf16.msra.mxu0 0
    %1517 = vmatprep.subr.bf16.mxu0 0
    %1518 = vmatpush1.bf16.msra.mxu0 0
    %1519 = vmatprep.subr.bf16.mxu0 0
    %1520 = vmatpush1.bf16.msra.mxu0 0
    %1521 = vmatprep.mubr.bf16.mxu0 0
    %1522 = vmatmul.mubr.bf16.gmra.mrb[0].mxu0 %v1487
    %v1523 = vpop.f32.mrb[0].mxu0
    %v1524 = vadd.f32 0.0, %v1523
    %v1525 = vpop.f32.mrb[0].mxu0
    %v1526 = vpop.f32.mrb[0].mxu0
    %v1527 = vadd.f32 0.0, %v1526
    %v1528 = vpop.f32.mrb[0].mxu0
    %1529 = vdwg.mxu0
    %1530 = vrot.lane.b32.xlu0 %v1167, 104
    %v1531 = vpop.permute.xlu0 %1530
    %1532 = vrot.lane.b32.xlu0 %v1167, 72
    %v1533 = vpop.permute.xlu0 %1532
    %v1535 = vsel %vm279, %v1531, 0
    %v1538 = vsel %vm279, %v1533, 0
    %1540 = vmatprep.subr.bf16.mxu0 0
    %1541 = vmatpush1.bf16.xpose.msra.mxu0 %v1538
    %1542 = vmatprep.subr.bf16.mxu0 0
    %1543 = vmatpush1.bf16.xpose.msra.mxu0 0
    %1544 = vmatprep.subr.bf16.mxu0 0
    %1545 = vmatpush1.bf16.xpose.msra.mxu0 0
    %1546 = vmatprep.subr.bf16.mxu0 0
    %1547 = vmatpush1.bf16.xpose.msra.mxu0 0
    %1548 = vmatprep.subr.bf16.mxu0 0
    %1549 = vmatpush1.bf16.xpose.msra.mxu0 0
    %1550 = vmatprep.subr.bf16.mxu0 0
    %1551 = vmatpush1.bf16.xpose.msra.mxu0 0
    %1552 = vmatprep.subr.bf16.mxu0 0
    %1553 = vmatpush1.bf16.xpose.msra.mxu0 0
    %1554 = vmatprep.subr.bf16.mxu0 0
    %1555 = vmatpush1.bf16.xpose.msra.mxu0 0
    %1556 = vmatprep.subr.bf16.mxu0 0
    %1557 = vmatpush1.bf16.xpose.msra.mxu0 0
    %1558 = vmatprep.subr.bf16.mxu0 0
    %1559 = vmatpush1.bf16.xpose.msra.mxu0 0
    %1560 = vmatprep.subr.bf16.mxu0 0
    %1561 = vmatpush1.bf16.xpose.msra.mxu0 0
    %1562 = vmatprep.subr.bf16.mxu0 0
    %1563 = vmatpush1.bf16.xpose.msra.mxu0 0
    %1564 = vmatprep.subr.bf16.mxu0 0
    %1565 = vmatpush1.bf16.xpose.msra.mxu0 0
    %1566 = vmatprep.subr.bf16.mxu0 0
    %1567 = vmatpush1.bf16.xpose.msra.mxu0 0
    %1568 = vmatprep.subr.bf16.mxu0 0
    %1569 = vmatpush1.bf16.xpose.msra.mxu0 0
    %1570 = vmatprep.subr.bf16.mxu0 0
    %1571 = vmatpush1.bf16.xpose.msra.mxu0 0
    %1572 = vmatprep.mubr.bf16.mxu0 0
    %1573 = vmatmul.mubr.bf16.gmra.mrb[0].mxu0 %v1535
    %v1574 = vpop.f32.mrb[0].mxu0
    %v1575 = vadd.f32 %v151, %v1574
    %v1576 = vpop.f32.mrb[0].mxu0
    %v1577 = vpop.f32.mrb[0].mxu0
    %v1578 = vadd.f32 %v152, %v1577
    %v1579 = vpop.f32.mrb[0].mxu0
    %1580 = vdwg.mxu0
    %v1581 = vsel %vm327, %v1575, -inf
    %1582 = vmax.xlane.f32.xlu0 %v1581
    %v1583 = vpop.xlane.xlu0 %1582
    %v1584 = vsel %vm327, %v1578, -inf
    %1585 = vmax.xlane.f32.xlu0 %v1584
    %v1586 = vpop.xlane.xlu0 %1585
    %v1587 = vsub.f32 %v1575, %v1583
    %v1588 = vsub.f32 %v1578, %v1586
    %v1589 = vmul.f32 %v1587, 1.442695
    %v1590 = vpow.pop %v1589
    %v1591 = vmul.f32 %v1588, 1.442695
    %v1592 = vpow.pop %v1591
    %v1593 = vsel %vm327, %v1590, 0.0
    %1594 = vadd.xlane.f32.xlu0 %v1593
    %v1595 = vpop.xlane.xlu0 %1594
    %v1596 = vsel %vm327, %v1592, 0.0
    %1597 = vadd.xlane.f32.xlu0 %v1596
    %v1598 = vpop.xlane.xlu0 %1597
    %v1599 = vrcp.pop %v1595
    %v1600 = vmul.f32 %v1590, %v1599
    %v1601 = vrcp.pop %v1598
    %v1602 = vmul.f32 %v1592, %v1601
    %v1603 = vpack.c.bf16 %v1602, %v1600
    %1604 = vrot.lane.b32.xlu0 %v1167, 40
    %v1605 = vpop.permute.xlu0 %1604
    %v1608 = vsel %vm327, %v1603, 0
    %1610 = vmatprep.subr.bf16.mxu0 0
    %1611 = vmatpush1.bf16.msra.mxu0 %v1605
    %1612 = vmatprep.subr.bf16.mxu0 0
    %1613 = vmatpush1.bf16.msra.mxu0 0
    %1614 = vmatprep.subr.bf16.mxu0 0
    %1615 = vmatpush1.bf16.msra.mxu0 0
    %1616 = vmatprep.subr.bf16.mxu0 0
    %1617 = vmatpush1.bf16.msra.mxu0 0
    %1618 = vmatprep.subr.bf16.mxu0 0
    %1619 = vmatpush1.bf16.msra.mxu0 0
    %1620 = vmatprep.subr.bf16.mxu0 0
    %1621 = vmatpush1.bf16.msra.mxu0 0
    %1622 = vmatprep.subr.bf16.mxu0 0
    %1623 = vmatpush1.bf16.msra.mxu0 0
    %1624 = vmatprep.subr.bf16.mxu0 0
    %1625 = vmatpush1.bf16.msra.mxu0 0
    %1626 = vmatprep.subr.bf16.mxu0 0
    %1627 = vmatpush1.bf16.msra.mxu0 0
    %1628 = vmatprep.subr.bf16.mxu0 0
    %1629 = vmatpush1.bf16.msra.mxu0 0
    %1630 = vmatprep.subr.bf16.mxu0 0
    %1631 = vmatpush1.bf16.msra.mxu0 0
    %1632 = vmatprep.subr.bf16.mxu0 0
    %1633 = vmatpush1.bf16.msra.mxu0 0
    %1634 = vmatprep.subr.bf16.mxu0 0
    %1635 = vmatpush1.bf16.msra.mxu0 0
    %1636 = vmatprep.subr.bf16.mxu0 0
    %1637 = vmatpush1.bf16.msra.mxu0 0
    %1638 = vmatprep.subr.bf16.mxu0 0
    %1639 = vmatpush1.bf16.msra.mxu0 0
    %1640 = vmatprep.subr.bf16.mxu0 0
    %1641 = vmatpush1.bf16.msra.mxu0 0
    %1642 = vmatprep.mubr.bf16.mxu0 0
    %1643 = vmatmul.mubr.bf16.gmra.mrb[0].mxu0 %v1608
    %v1644 = vpop.f32.mrb[0].mxu0
    %v1645 = vadd.f32 0.0, %v1644
    %v1646 = vpop.f32.mrb[0].mxu0
    %v1647 = vpop.f32.mrb[0].mxu0
    %v1648 = vadd.f32 0.0, %v1647
    %v1649 = vpop.f32.mrb[0].mxu0
    %1650 = vdwg.mxu0
    %1653 = vrot.lane.b32.xlu0 %v1403, 8
    %v1654 = vpop.permute.xlu0 %1653
    %1655 = vrot.lane.b32.xlu0 %v1406, 8
    %v1656 = vpop.permute.xlu0 %1655
    %1661 = vrot.lane.b32.xlu0 %v1524, 16
    %v1662 = vpop.permute.xlu0 %1661
    %1663 = vrot.lane.b32.xlu0 %v1527, 16
    %v1664 = vpop.permute.xlu0 %1663
    %1669 = vrot.lane.b32.xlu0 %v1645, 24
    %v1670 = vpop.permute.xlu0 %1669
    %1671 = vrot.lane.b32.xlu0 %v1648, 24
    %v1672 = vpop.permute.xlu0 %1671
    %v1675 = vsel %vm279, %v1282, %v1654
    %v1676 = vsel %vm279, %v1285, %v1656
    %v1677 = vsel %vm327, %v1675, %v1662
    %v1678 = vsel %vm327, %v1676, %v1664
    %v1679 = vsel %vm789, %v1677, %v1670
    %v1680 = vsel %vm789, %v1678, %v1672
    %v1681 = vpack.c.bf16 %v1680, %v1679
    %v1682 = vlaneseq
    %v1683 = vshrl.u32 %v1682, 7
    %v1684 = vsub.s32 3, %v1683
    %v1685 = vrot.slane %v1047, %v1684
    %v1690 = vunpack.c.l.b16 %v1052
    %v1691 = vunpack.c.l.b16 %v1053
    %v1692 = vunpack.c.l.b16 %v1054
    %v1693 = vunpack.c.l.b16 %v1055
    %v1694 = vpack.c.b16 %v1691, %v1690
    %v1695 = vpack.c.b16 %v1693, %v1692
    %v1699 = vsel %vm174, %v1681, 0
    %1701 = vmatprep.subr.bf16.mxu0 0
    %1702 = vmatpush1.bf16.msra.mxu0 %v1694
    %1703 = vmatprep.subr.bf16.mxu0 0
    %1704 = vmatpush1.bf16.msra.mxu0 %v1695
    %1705 = vmatprep.subr.bf16.mxu0 0
    %1706 = vmatpush1.bf16.msra.mxu0 0
    %1707 = vmatprep.subr.bf16.mxu0 0
    %1708 = vmatpush1.bf16.msra.mxu0 0
    %1709 = vmatprep.subr.bf16.mxu0 0
    %1710 = vmatpush1.bf16.msra.mxu0 0
    %1711 = vmatprep.subr.bf16.mxu0 0
    %1712 = vmatpush1.bf16.msra.mxu0 0
    %1713 = vmatprep.subr.bf16.mxu0 0
    %1714 = vmatpush1.bf16.msra.mxu0 0
    %1715 = vmatprep.subr.bf16.mxu0 0
    %1716 = vmatpush1.bf16.msra.mxu0 0
    %1717 = vmatprep.subr.bf16.mxu0 0
    %1718 = vmatpush1.bf16.msra.mxu0 0
    %1719 = vmatprep.subr.bf16.mxu0 0
    %1720 = vmatpush1.bf16.msra.mxu0 0
    %1721 = vmatprep.subr.bf16.mxu0 0
    %1722 = vmatpush1.bf16.msra.mxu0 0
    %1723 = vmatprep.subr.bf16.mxu0 0
    %1724 = vmatpush1.bf16.msra.mxu0 0
    %1725 = vmatprep.subr.bf16.mxu0 0
    %1726 = vmatpush1.bf16.msra.mxu0 0
    %1727 = vmatprep.subr.bf16.mxu0 0
    %1728 = vmatpush1.bf16.msra.mxu0 0
    %1729 = vmatprep.subr.bf16.mxu0 0
    %1730 = vmatpush1.bf16.msra.mxu0 0
    %1731 = vmatprep.subr.bf16.mxu0 0
    %1732 = vmatpush1.bf16.msra.mxu0 0
    %1733 = vmatprep.mubr.bf16.mxu0 0
    %1734 = vmatmul.mubr.bf16.gmra.mrb[0].mxu0 %v1699
    %v1735 = vpop.f32.mrb[0].mxu0
    %v1736 = vadd.f32 %v1685, %v1735
    %v1737 = vpop.f32.mrb[0].mxu0
    %v1738 = vpop.f32.mrb[0].mxu0
    %v1739 = vadd.f32 %v1685, %v1738
    %v1740 = vpop.f32.mrb[0].mxu0
    %1741 = vdwg.mxu0
    %v1742 = vadd.f32 %v1045, %v1736
    %v1743 = vadd.f32 %v1046, %v1739
    %v1744 = vsel %vm174, %v1742, 0.0
    %1745 = vadd.xlane.f32.xlu0 %v1744
    %v1746 = vpop.xlane.xlu0 %1745
    %v1747 = vsel %vm174, %v1743, 0.0
    %1748 = vadd.xlane.f32.xlu0 %v1747
    %v1749 = vpop.xlane.xlu0 %1748
    %v1750 = vmul.f32 %v1746, %v181
    %v1751 = vmul.f32 %v1749, %v181
    %v1752 = vsub.f32 %v1742, %v1750
    %v1753 = vsub.f32 %v1743, %v1751
    %v1754 = vmul.f32 %v1752, %v1752
    %v1755 = vmul.f32 %v1753, %v1753
    %v1756 = vsel %vm174, %v1754, 0.0
    %1757 = vadd.xlane.f32.xlu0 %v1756
    %v1758 = vpop.xlane.xlu0 %1757
    %v1759 = vsel %vm174, %v1755, 0.0
    %1760 = vadd.xlane.f32.xlu0 %v1759
    %v1761 = vpop.xlane.xlu0 %1760
    %v1762 = vmul.f32 %v1758, %v181
    %v1763 = vmul.f32 %v1761, %v181
    %v1764 = vadd.f32 %v1762, 1e-05
    %v1765 = vadd.f32 %v1763, 1e-05
    %v1766 = vrsqrt.pop %v1764
    %v1767 = vrsqrt.pop %v1765
    %v1768 = vmul.f32 %v1752, %v1766
    %v1769 = vmul.f32 %v1753, %v1767
    %v1770 = vlaneseq
    %v1771 = vshrl.u32 %v1770, 7
    %v1772 = vsub.s32 4, %v1771
    %v1773 = vrot.slane %v1047, %v1772
    %v1774 = vmul.f32 %v1768, %v1773
    %v1775 = vmul.f32 %v1769, %v1773
    %v1776 = vlaneseq
    %v1777 = vshrl.u32 %v1776, 7
    %v1778 = vsub.s32 5, %v1777
    %v1779 = vrot.slane %v1047, %v1778
    %v1780 = vadd.f32 %v1774, %v1779
    %v1781 = vadd.f32 %v1775, %v1779
    %v1782 = vpack.c.bf16 %v1781, %v1780
    %v1783 = vlaneseq
    %v1784 = vshrl.u32 %v1783, 7
    %v1785 = vsub.s32 6, %v1784
    %v1786 = vrot.slane %v1047, %v1785
    %v1791 = vunpack.c.l.b16 %v1056
    %v1792 = vunpack.c.l.b16 %v1057
    %v1793 = vunpack.c.l.b16 %v1058
    %v1794 = vunpack.c.l.b16 %v1059
    %v1795 = vpack.c.b16 %v1792, %v1791
    %v1796 = vpack.c.b16 %v1794, %v1793
    %v1800 = vsel %vm174, %v1782, 0
    %1802 = vmatprep.subr.bf16.mxu0 0
    %1803 = vmatpush1.bf16.msra.mxu0 %v1795
    %1804 = vmatprep.subr.bf16.mxu0 0
    %1805 = vmatpush1.bf16.msra.mxu0 %v1796
    %1806 = vmatprep.subr.bf16.mxu0 0
    %1807 = vmatpush1.bf16.msra.mxu0 0
    %1808 = vmatprep.subr.bf16.mxu0 0
    %1809 = vmatpush1.bf16.msra.mxu0 0
    %1810 = vmatprep.subr.bf16.mxu0 0
    %1811 = vmatpush1.bf16.msra.mxu0 0
    %1812 = vmatprep.subr.bf16.mxu0 0
    %1813 = vmatpush1.bf16.msra.mxu0 0
    %1814 = vmatprep.subr.bf16.mxu0 0
    %1815 = vmatpush1.bf16.msra.mxu0 0
    %1816 = vmatprep.subr.bf16.mxu0 0
    %1817 = vmatpush1.bf16.msra.mxu0 0
    %1818 = vmatprep.subr.bf16.mxu0 0
    %1819 = vmatpush1.bf16.msra.mxu0 0
    %1820 = vmatprep.subr.bf16.mxu0 0
    %1821 = vmatpush1.bf16.msra.mxu0 0
    %1822 = vmatprep.subr.bf16.mxu0 0
    %1823 = vmatpush1.bf16.msra.mxu0 0
    %1824 = vmatprep.subr.bf16.mxu0 0
    %1825 = vmatpush1.bf16.msra.mxu0 0
    %1826 = vmatprep.subr.bf16.mxu0 0
    %1827 = vmatpush1.bf16.msra.mxu0 0
    %1828 = vmatprep.subr.bf16.mxu0 0
    %1829 = vmatpush1.bf16.msra.mxu0 0
    %1830 = vmatprep.subr.bf16.mxu0 0
    %1831 = vmatpush1.bf16.msra.mxu0 0
    %1832 = vmatprep.subr.bf16.mxu0 0
    %1833 = vmatpush1.bf16.msra.mxu0 0
    %1834 = vmatprep.mubr.bf16.mxu0 0
    %1835 = vmatmul.mubr.bf16.gmra.mrb[0].mxu0 %v1800
    %v1836 = vpop.f32.mrb[0].mxu0
    %v1837 = vadd.f32 %v1786, %v1836
    %v1838 = vpop.f32.mrb[0].mxu0
    %v1839 = vpop.f32.mrb[0].mxu0
    %v1840 = vadd.f32 %v1786, %v1839
    %v1841 = vpop.f32.mrb[0].mxu0
    %1842 = vdwg.mxu0
    %v1843 = vmul.f32 %v1837, 0.5
    %v1844 = vmul.f32 %v1840, 0.5
    %v1845 = vmul.f32 %v1837, 0.044715
    %v1846 = vmul.f32 %v1840, 0.044715
    %v1847 = vmul.f32 %v1845, %v1837
    %v1848 = vmul.f32 %v1846, %v1840
    %v1849 = vmul.f32 %v1847, %v1837
    %v1850 = vmul.f32 %v1848, %v1840
    %v1851 = vadd.f32 %v1837, %v1849
    %v1852 = vadd.f32 %v1840, %v1850
    %v1853 = vmul.f32 %v1851, 0.7978846
    %v1854 = vmul.f32 %v1852, 0.7978846
    %v1855 = vtanh.pop %v1853
    %v1856 = vtanh.pop %v1854
    %v1857 = vadd.f32 %v1855, 1.0
    %v1858 = vadd.f32 %v1856, 1.0
    %v1859 = vmul.f32 %v1843, %v1857
    %v1860 = vmul.f32 %v1844, %v1858
    %v1861 = vpack.c.bf16 %v1860, %v1859
    %v1862 = vlaneseq
    %v1863 = vshrl.u32 %v1862, 7
    %v1864 = vsub.s32 7, %v1863
    %v1865 = vrot.slane %v1047, %v1864
    %v1874 = vunpack.c.l.b16 %v1060
    %v1875 = vunpack.c.l.b16 %v1061
    %v1876 = vunpack.c.l.b16 %v1062
    %v1877 = vunpack.c.l.b16 %v1063
    %v1878 = vunpack.c.l.b16 %v1064
    %v1879 = vunpack.c.l.b16 %v1065
    %v1880 = vunpack.c.l.b16 %v1066
    %v1881 = vunpack.c.l.b16 %v1067
    %v1882 = vpack.c.b16 %v1875, %v1874
    %v1883 = vpack.c.b16 %v1877, %v1876
    %v1884 = vpack.c.b16 %v1879, %v1878
    %v1885 = vpack.c.b16 %v1881, %v1880
    %v1891 = vsel %vm69, %v1861, 0
    %1893 = vmatprep.subr.bf16.mxu0 0
    %1894 = vmatpush1.bf16.msra.mxu0 %v1882
    %1895 = vmatprep.subr.bf16.mxu0 0
    %1896 = vmatpush1.bf16.msra.mxu0 %v1883
    %1897 = vmatprep.subr.bf16.mxu0 0
    %1898 = vmatpush1.bf16.msra.mxu0 %v1884
    %1899 = vmatprep.subr.bf16.mxu0 0
    %1900 = vmatpush1.bf16.msra.mxu0 %v1885
    %1901 = vmatprep.subr.bf16.mxu0 0
    %1902 = vmatpush1.bf16.msra.mxu0 0
    %1903 = vmatprep.subr.bf16.mxu0 0
    %1904 = vmatpush1.bf16.msra.mxu0 0
    %1905 = vmatprep.subr.bf16.mxu0 0
    %1906 = vmatpush1.bf16.msra.mxu0 0
    %1907 = vmatprep.subr.bf16.mxu0 0
    %1908 = vmatpush1.bf16.msra.mxu0 0
    %1909 = vmatprep.subr.bf16.mxu0 0
    %1910 = vmatpush1.bf16.msra.mxu0 0
    %1911 = vmatprep.subr.bf16.mxu0 0
    %1912 = vmatpush1.bf16.msra.mxu0 0
    %1913 = vmatprep.subr.bf16.mxu0 0
    %1914 = vmatpush1.bf16.msra.mxu0 0
    %1915 = vmatprep.subr.bf16.mxu0 0
    %1916 = vmatpush1.bf16.msra.mxu0 0
    %1917 = vmatprep.subr.bf16.mxu0 0
    %1918 = vmatpush1.bf16.msra.mxu0 0
    %1919 = vmatprep.subr.bf16.mxu0 0
    %1920 = vmatpush1.bf16.msra.mxu0 0
    %1921 = vmatprep.subr.bf16.mxu0 0
    %1922 = vmatpush1.bf16.msra.mxu0 0
    %1923 = vmatprep.subr.bf16.mxu0 0
    %1924 = vmatpush1.bf16.msra.mxu0 0
    %1925 = vmatprep.mubr.bf16.mxu0 0
    %1926 = vmatmul.mubr.bf16.gmra.mrb[0].mxu0 %v1891
    %v1927 = vpop.f32.mrb[0].mxu0
    %v1928 = vadd.f32 %v1865, %v1927
    %v1929 = vpop.f32.mrb[0].mxu0
    %v1930 = vpop.f32.mrb[0].mxu0
    %v1931 = vadd.f32 %v1865, %v1930
    %v1932 = vpop.f32.mrb[0].mxu0
    %1933 = vdwg.mxu0
    %v1934 = vadd.f32 %v1742, %v1928
    %v1935 = vadd.f32 %v1743, %v1931
    %1936 = vst.msk [vmem:[%s3] sm:$0xff] %vm174, %v1934
    %1937 = vst.msk [vmem:[%s3 + $0x8] sm:$0xff] %vm174, %v1935
    %1938 = vst.msk [vmem:[%s3 + $0x10] sm:$0xff] %vm174, %v1045
    %1939 = vst.msk [vmem:[%s3 + $0x18] sm:$0xff] %vm174, %v1046
    // Predicated region
    $region22: #{_fused_forward.1} parent=1 // pred_check
      _
    $region23: #{_fused_forward.1} parent=1 // pred_check_branch
      %1941 = sbr.rel (0) target = $region25
    $region24: #{_fused_forward.1} parent=1 // pred_region
      _
    $region25: #{_fused_forward.1} parent=1 // pred_fallthru
      _
    // Predicated region
    $region26: #{_fused_forward.1} parent=1 // pred_check
      _
    $region27: #{_fused_forward.1} parent=1 // pred_check_branch
      %1943 = sbr.rel (0) target = $region29
    $region28: #{_fused_forward.1} parent=1 // pred_region
      _
    $region29: #{_fused_forward.1} parent=1 // pred_fallthru
      _
    %1944 = vsyncpa [#allocation3], 1
    %1945 = vsyncpa [#allocation5], 1

</llo_original>
